<compile_context>
chip_gen: v5e
topology: v5e:2x2
jax: 0.10.0
libtpu: 0.0.40
codegen_flags: <defaults>
</compile_context>

<pallas_src>
import math
import functools

import jax
import jax.numpy as jnp
from jax.experimental import pallas as pl
from jax.experimental.pallas import tpu as pltpu


def mha_kernel(q_in_ref, c_in_ref,
               wq_ref, bq_ref, wkv_ref, bkv_ref, wo_ref, bo_ref,
               out_ref, *, num_heads, dim_head, batch_block):
    Nb = batch_block
    S = q_in_ref.shape[1]
    T = c_in_ref.shape[1]
    Dq = q_in_ref.shape[2]
    Dc = c_in_ref.shape[2]
    E = num_heads * dim_head
    M = Nb * S
    Mk = Nb * T

    # Flatten the batch block: the projection matmuls see M = Nb*S (resp.
    # Mk = Nb*T) rows, filling MXU sublanes and amortizing per-step overhead.
    # bf16 MXU inputs; accumulation stays f32 via preferred_element_type.
    xq = q_in_ref[...].reshape(M, Dq).astype(jnp.bfloat16)
    xc = c_in_ref[...].reshape(Mk, Dc).astype(jnp.bfloat16)

    # Fused projections (Wq pre-scaled by 1/sqrt(dim_head); Wkv = [Wk | Wv]
    # over all heads).  Replaces six 8-wide matmuls with two wide ones.
    q_all = jnp.dot(xq, wq_ref[...],
                    preferred_element_type=jnp.float32) + bq_ref[...]   # (M, E)
    kv_all = jnp.dot(xc, wkv_ref[...],
                     preferred_element_type=jnp.float32) + bkv_ref[...]  # (Mk, 2E)

    # Per-head score / softmax / P.V.  H is tiny and static -> unrolled loop;
    # static 8-lane head slices of the fused projection outputs are cheap.
    y_heads = []
    for h in range(num_heads):
        lo = h * dim_head
        qh = q_all[:, lo:lo + dim_head].reshape(Nb, S, dim_head)
        kh = kv_all[:, lo:lo + dim_head].reshape(Nb, T, dim_head)
        vh = kv_all[:, E + lo:E + lo + dim_head].reshape(Nb, T, dim_head)

        # NT contraction: contract last dims of q and k, batch over Nb
        # (lowers to dot_general (((2,),(2,)),((0,),(0,))); no k transpose).
        s = jnp.einsum('bsd,btd->bst', qh, kh,
                       preferred_element_type=jnp.float32)           # (Nb,S,T)

        # TODO(synk): attn_mask path (masked_fill with -inf) not wired; forward
        # is exercised with attn_mask=None as in the demo.
        s_max = jnp.max(s, axis=-1, keepdims=True)
        p = jnp.exp(s - s_max)
        p = p * pl.reciprocal(jnp.sum(p, axis=-1, keepdims=True), approx=True)

        y = jnp.einsum('bst,btd->bsd',
                       p.astype(jnp.bfloat16), vh.astype(jnp.bfloat16),
                       preferred_element_type=jnp.float32)           # (Nb,S,dh)
        y_heads.append(y.reshape(M, dim_head))

    # Concatenate heads along lanes and do ONE fused output projection
    # (M,E)@(E,Dq) instead of H accumulating 8-wide matmuls.
    y_cat = jnp.concatenate(y_heads, axis=-1).astype(jnp.bfloat16)    # (M, E)
    out = jnp.dot(y_cat, wo_ref[...],
                  preferred_element_type=jnp.float32) + bo_ref[...]   # (M, Dq)

    # Dropout(p=0) / eval mode -> identity.  Lane-dense (Dq=128) output store.
    out_ref[...] = out.reshape(Nb, S, Dq).astype(out_ref.dtype)


def _tensorcores_per_chip():
    """Best-effort: v7x has 2 TensorCores/chip, v5e/v6e have 1."""
    try:
        kind = jax.devices()[0].device_kind.lower()
    except Exception:
        return 1
    return 2 if "7" in kind else 1


def multi_head_attention(query, context, params, *, num_heads, dim_head,
                         batch_block=None, num_tensorcores=None):
    """query: (N, S, Dq), context: (N, T, Dc). Returns (N, S, Dq).

    `params` are the torch-equivalent linear weights pre-transposed to
    (in_features, out_features) and biases as (1, out_features).
    """
    N, S, Dq = query.shape
    _, T, Dc = context.shape
    E = num_heads * dim_head
    wq, bq, wk, bk, wv, bv, wo, bo = params
    assert wq.shape == (Dq, E) and wo.shape == (E, Dq)

    # ---- parameter preprocessing (wrapper-side, zero in-kernel cost) -------
    # NOTE: 1/sqrt(dim_head) is folded into Wq/bq and all weights are stored
    # in bf16 for the MXU, so the packed parameters intentionally differ from
    # the raw torch checkpoint values (document for weight-loading/debugging).
    scale = 1.0 / math.sqrt(dim_head)
    wq_f = (wq * scale).astype(jnp.bfloat16)                         # (Dq, E)
    bq_f = (bq * scale).astype(jnp.float32)                          # (1, E)
    wkv_f = jnp.concatenate([wk, wv], axis=1).astype(jnp.bfloat16)   # (Dc, 2E)
    bkv_f = jnp.concatenate([bk, bv], axis=1).astype(jnp.float32)    # (1, 2E)
    wo_f = wo.astype(jnp.bfloat16)                                   # (E, Dq)
    bo_f = bo.astype(jnp.float32)                                    # (1, Dq)

    # ---- generation-aware batch blocking: grid == #TensorCores -------------
    # v5e/v6e (1 TC): a single grid step (no exposed per-step overhead,
    # M = N*S rows per matmul).  v7x (2 TC): two "parallel" steps so both
    # cores get work.  Prime / non-divisible N falls back to one big step.
    if batch_block is None:
        n_tc = (num_tensorcores if num_tensorcores is not None
                else _tensorcores_per_chip())
        if n_tc > 1 and N % n_tc == 0:
            batch_block = N // n_tc
        else:
            batch_block = N
    Nb = batch_block
    assert N % Nb == 0, "batch must be divisible by the batch block"

    kernel = functools.partial(mha_kernel, num_heads=num_heads,
                               dim_head=dim_head, batch_block=Nb)

    def const_spec(shape):
        # Grid-invariant operand: constant index_map -> DMA'd once, reused.
        # (pl.Buffered(1) single-buffering only matters once E grows to
        # production sizes; at E=16 the default double buffer is a few KiB.)
        zeros = (0,) * len(shape)
        return pl.BlockSpec(shape, lambda n, _z=zeros: _z)

    # TODO(synk): for realistic perceiver cross-attention (large T / Dc) add a
    # T grid axis with flash-style online softmax and re-derive the context
    # tile against v7x's 64 MiB VMEM (vs 128 MiB on v5e/v6e).
    return pl.pallas_call(
        kernel,
        out_shape=jax.ShapeDtypeStruct((N, S, Dq), query.dtype),
        grid_spec=pltpu.PrefetchScalarGridSpec(
            num_scalar_prefetch=0,
            grid=(N // Nb,),
            in_specs=[
                pl.BlockSpec((Nb, S, Dq), lambda n: (n, 0, 0)),   # query block
                pl.BlockSpec((Nb, T, Dc), lambda n: (n, 0, 0)),   # context block
                const_spec((Dq, E)), const_spec((1, E)),          # Wq, bq (scaled)
                const_spec((Dc, 2 * E)), const_spec((1, 2 * E)),  # W_kv, b_kv
                const_spec((E, Dq)), const_spec((1, Dq)),         # Wo, bo
            ],
            out_specs=pl.BlockSpec((Nb, S, Dq), lambda n: (n, 0, 0)),
        ),
        compiler_params=pltpu.CompilerParams(
            dimension_semantics=("parallel",),
            # Actual footprint here is << 1 MiB; 32 MiB is safe on every
            # generation (v7x scoped default).  Re-budget (<= ~48-56 MiB on
            # v7x, <= ~100 MiB on v5e/v6e) when T/E grow.
            vmem_limit_bytes=32 * 1024 * 1024,
        ),
    )(query, context, wq_f, bq_f, wkv_f, bkv_f, wo_f, bo_f)


def reference_mha(query, context, params, *, num_heads, dim_head):
    """Pure-JAX f32 reference mirroring the torch module exactly."""
    wq, bq, wk, bk, wv, bv, wo, bo = params
    N, S, _ = query.shape
    _, T, _ = context.shape
    E = num_heads * dim_head
    q = query @ wq + bq[0]
    k = context @ wk + bk[0]
    v = context @ wv + bv[0]
    qs = q.reshape(N, S, num_heads, dim_head).transpose(0, 2, 1, 3)
    ks = k.reshape(N, T, num_heads, dim_head).transpose(0, 2, 1, 3)
    vs = v.reshape(N, T, num_heads, dim_head).transpose(0, 2, 1, 3)
    a = jnp.einsum('nhsd,nhtd->nhst', qs, ks) / math.sqrt(dim_head)
    e = jax.nn.softmax(a, axis=-1)
    y = jnp.einsum('nhst,nhtd->nhsd', e, vs)
    y = y.transpose(0, 2, 1, 3).reshape(N, S, E)
    return y @ wo + bo[0]


if __name__ == "__main__":
    # Shapes implied by EncoderPerceiver's latent transformer blocks:
    #   latent_dim=128, num_latents=32, latent_heads=2, latent_dim_head=8.
    N = 8                     # batch
    S = T = 32                # num_latents
    query_dim = context_dim = 128
    num_heads, dim_head = 2, 8
    E = num_heads * dim_head

    key = jax.random.PRNGKey(0)
    ks = jax.random.split(key, 10)
    dt = jnp.float32

    # Deterministic "Linear" parameters, stored as (in, out) / (1, out).
    wq = jax.random.normal(ks[0], (query_dim, E), dt) * 0.05
    bq = jax.random.normal(ks[1], (1, E), dt) * 0.05
    wk = jax.random.normal(ks[2], (context_dim, E), dt) * 0.05
    bk = jax.random.normal(ks[3], (1, E), dt) * 0.05
    wv = jax.random.normal(ks[4], (context_dim, E), dt) * 0.05
    bv = jax.random.normal(ks[5], (1, E), dt) * 0.05
    wo = jax.random.normal(ks[6], (E, query_dim), dt) * 0.05
    bo = jax.random.normal(ks[7], (1, query_dim), dt) * 0.05
    params = (wq, bq, wk, bk, wv, bv, wo, bo)

    query = jax.random.normal(ks[8], (N, S, query_dim), dt)
    context = jax.random.normal(ks[9], (N, T, context_dim), dt)

    out = multi_head_attention(query, context, params,
                               num_heads=num_heads, dim_head=dim_head)
    out = jax.block_until_ready(out)

    ref = reference_mha(query, context, params,
                        num_heads=num_heads, dim_head=dim_head)
    assert out.shape == (N, S, query_dim)
    # bf16 MXU inputs (f32 accumulation) + approx EUP reciprocal in the
    # softmax -> allow a few e-3 of deviation vs the f32 reference.
    assert jnp.allclose(out, ref, atol=5e-3, rtol=5e-3), "mismatch vs reference"

    print("KERNEL_OK")
</pallas_src>

<mosaic_0001>
module attributes {stable_mosaic.version = 11 : i64} {
  func.func @mha_kernel(%arg0: i32, %arg1: memref<8x32x128xf32, #tpu.memory_space<vmem>>, %arg2: memref<8x32x128xf32, #tpu.memory_space<vmem>>, %arg3: memref<128x16xbf16, #tpu.memory_space<vmem>>, %arg4: memref<1x16xf32, #tpu.memory_space<vmem>>, %arg5: memref<128x32xbf16, #tpu.memory_space<vmem>>, %arg6: memref<1x32xf32, #tpu.memory_space<vmem>>, %arg7: memref<16x128xbf16, #tpu.memory_space<vmem>>, %arg8: memref<1x128xf32, #tpu.memory_space<vmem>>, %arg9: memref<8x32x128xf32, #tpu.memory_space<vmem>>) attributes {dimension_semantics = [#tpu.dimension_semantics<parallel>], iteration_bounds = array<i64: 1>, scalar_prefetch = 0 : i64, scratch_operands = 0 : i64, tpu.core_type = #tpu.core_type<tc>, window_params = [{transform_indices = @transform_0, window_bounds = array<i64: 8, 32, 128>}, {transform_indices = @transform_1, window_bounds = array<i64: 8, 32, 128>}, {pipeline_mode = #tpu.pipeline_mode<synchronous>, transform_indices = @transform_2, window_bounds = array<i64: 128, 16>}, {pipeline_mode = #tpu.pipeline_mode<synchronous>, transform_indices = @transform_3, window_bounds = array<i64: 1, 16>}, {pipeline_mode = #tpu.pipeline_mode<synchronous>, transform_indices = @transform_4, window_bounds = array<i64: 128, 32>}, {pipeline_mode = #tpu.pipeline_mode<synchronous>, transform_indices = @transform_5, window_bounds = array<i64: 1, 32>}, {pipeline_mode = #tpu.pipeline_mode<synchronous>, transform_indices = @transform_6, window_bounds = array<i64: 16, 128>}, {pipeline_mode = #tpu.pipeline_mode<synchronous>, transform_indices = @transform_7, window_bounds = array<i64: 1, 128>}, {transform_indices = @transform_8, window_bounds = array<i64: 8, 32, 128>}]} {
    %c0 = arith.constant 0 : index
    %c0_0 = arith.constant 0 : index
    %c0_1 = arith.constant 0 : index
    %0 = vector.load %arg1[%c0, %c0_0, %c0_1] : memref<8x32x128xf32, #tpu.memory_space<vmem>>, vector<8x32x128xf32>
    %1 = vector.shape_cast %0 : vector<8x32x128xf32> to vector<256x128xf32>
    %2 = arith.truncf %1 : vector<256x128xf32> to vector<256x128xbf16>
    %c0_2 = arith.constant 0 : index
    %c0_3 = arith.constant 0 : index
    %c0_4 = arith.constant 0 : index
    %3 = vector.load %arg2[%c0_2, %c0_3, %c0_4] : memref<8x32x128xf32, #tpu.memory_space<vmem>>, vector<8x32x128xf32>
    %4 = vector.shape_cast %3 : vector<8x32x128xf32> to vector<256x128xf32>
    %5 = arith.truncf %4 : vector<256x128xf32> to vector<256x128xbf16>
    %c0_5 = arith.constant 0 : index
    %c0_6 = arith.constant 0 : index
    %6 = vector.load %arg3[%c0_5, %c0_6] : memref<128x16xbf16, #tpu.memory_space<vmem>>, vector<128x16xbf16>
    %cst = arith.constant dense<0.000000e+00> : vector<256x16xf32>
    %7 = tpu.matmul %2, %6, %cst {dimension_numbers = #tpu.dot_dimension_numbers<[1], [0], [0], [1], [0, 0, 1, 1], [], []>} : vector<256x128xbf16>, vector<128x16xbf16>, vector<256x16xf32> -> vector<256x16xf32>
    %c0_7 = arith.constant 0 : index
    %c0_8 = arith.constant 0 : index
    %8 = vector.load %arg4[%c0_7, %c0_8] : memref<1x16xf32, #tpu.memory_space<vmem>>, vector<1x16xf32>
    %9 = vector.broadcast %8 : vector<1x16xf32> to vector<256x16xf32>
    %10 = arith.addf %7, %9 : vector<256x16xf32>
    %c0_9 = arith.constant 0 : index
    %c0_10 = arith.constant 0 : index
    %11 = vector.load %arg5[%c0_9, %c0_10] : memref<128x32xbf16, #tpu.memory_space<vmem>>, vector<128x32xbf16>
    %cst_11 = arith.constant dense<0.000000e+00> : vector<256x32xf32>
    %12 = tpu.matmul %5, %11, %cst_11 {dimension_numbers = #tpu.dot_dimension_numbers<[1], [0], [0], [1], [0, 0, 1, 1], [], []>} : vector<256x128xbf16>, vector<128x32xbf16>, vector<256x32xf32> -> vector<256x32xf32>
    %c0_12 = arith.constant 0 : index
    %c0_13 = arith.constant 0 : index
    %13 = vector.load %arg6[%c0_12, %c0_13] : memref<1x32xf32, #tpu.memory_space<vmem>>, vector<1x32xf32>
    %14 = vector.broadcast %13 : vector<1x32xf32> to vector<256x32xf32>
    %15 = arith.addf %12, %14 : vector<256x32xf32>
    %16 = vector.extract_strided_slice %10 {offsets = [0, 0], sizes = [256, 8], strides = [1, 1]} : vector<256x16xf32> to vector<256x8xf32>
    %17 = vector.shape_cast %16 : vector<256x8xf32> to vector<8x32x8xf32>
    %18 = vector.extract_strided_slice %15 {offsets = [0, 0], sizes = [256, 8], strides = [1, 1]} : vector<256x32xf32> to vector<256x8xf32>
    %19 = vector.shape_cast %18 : vector<256x8xf32> to vector<8x32x8xf32>
    %20 = vector.extract_strided_slice %15 {offsets = [0, 16], sizes = [256, 8], strides = [1, 1]} : vector<256x32xf32> to vector<256x8xf32>
    %21 = vector.shape_cast %20 : vector<256x8xf32> to vector<8x32x8xf32>
    "tpu.trace_start"() <{level = 10 : i32, message = "bsd,btd->bst"}> : () -> ()
    %cst_14 = arith.constant dense<0.000000e+00> : vector<8x32x32xf32>
    %22 = tpu.matmul %17, %19, %cst_14 {dimension_numbers = #tpu.dot_dimension_numbers<[2], [2], [1], [1], [0, 0, 0, 1, 1, 1], [0], [0]>} : vector<8x32x8xf32>, vector<8x32x8xf32>, vector<8x32x32xf32> -> vector<8x32x32xf32>
    "tpu.trace_stop"() : () -> ()
    %cst_15 = arith.constant dense<0xFF800000> : vector<8x32xf32>
    %23 = vector.multi_reduction <maximumf>, %22, %cst_15 [2] : vector<8x32x32xf32> to vector<8x32xf32>
    %24 = vector.shape_cast %23 : vector<8x32xf32> to vector<8x32x1xf32>
    %25 = vector.broadcast %24 : vector<8x32x1xf32> to vector<8x32x32xf32>
    %26 = arith.subf %22, %25 : vector<8x32x32xf32>
    %27 = math.exp %26 : vector<8x32x32xf32>
    %cst_16 = arith.constant dense<0.000000e+00> : vector<8x32xf32>
    %28 = vector.multi_reduction <add>, %27, %cst_16 [2] : vector<8x32x32xf32> to vector<8x32xf32>
    %29 = vector.shape_cast %28 : vector<8x32xf32> to vector<8x32x1xf32>
    %30 = tpu.reciprocal %29 {approx = true} : vector<8x32x1xf32> -> vector<8x32x1xf32>
    %31 = vector.broadcast %30 : vector<8x32x1xf32> to vector<8x32x32xf32>
    %32 = arith.mulf %27, %31 : vector<8x32x32xf32>
    %33 = arith.truncf %32 : vector<8x32x32xf32> to vector<8x32x32xbf16>
    %34 = arith.truncf %21 : vector<8x32x8xf32> to vector<8x32x8xbf16>
    "tpu.trace_start"() <{level = 10 : i32, message = "bst,btd->bsd"}> : () -> ()
    %cst_17 = arith.constant dense<0.000000e+00> : vector<8x32x8xf32>
    %35 = tpu.matmul %33, %34, %cst_17 {dimension_numbers = #tpu.dot_dimension_numbers<[2], [1], [1], [2], [0, 0, 0, 1, 1, 2], [0], [0]>} : vector<8x32x32xbf16>, vector<8x32x8xbf16>, vector<8x32x8xf32> -> vector<8x32x8xf32>
    "tpu.trace_stop"() : () -> ()
    %36 = vector.shape_cast %35 : vector<8x32x8xf32> to vector<256x8xf32>
    %37 = vector.extract_strided_slice %10 {offsets = [0, 8], sizes = [256, 8], strides = [1, 1]} : vector<256x16xf32> to vector<256x8xf32>
    %38 = vector.shape_cast %37 : vector<256x8xf32> to vector<8x32x8xf32>
    %39 = vector.extract_strided_slice %15 {offsets = [0, 8], sizes = [256, 8], strides = [1, 1]} : vector<256x32xf32> to vector<256x8xf32>
    %40 = vector.shape_cast %39 : vector<256x8xf32> to vector<8x32x8xf32>
    %41 = vector.extract_strided_slice %15 {offsets = [0, 24], sizes = [256, 8], strides = [1, 1]} : vector<256x32xf32> to vector<256x8xf32>
    %42 = vector.shape_cast %41 : vector<256x8xf32> to vector<8x32x8xf32>
    "tpu.trace_start"() <{level = 10 : i32, message = "bsd,btd->bst"}> : () -> ()
    %cst_18 = arith.constant dense<0.000000e+00> : vector<8x32x32xf32>
    %43 = tpu.matmul %38, %40, %cst_18 {dimension_numbers = #tpu.dot_dimension_numbers<[2], [2], [1], [1], [0, 0, 0, 1, 1, 1], [0], [0]>} : vector<8x32x8xf32>, vector<8x32x8xf32>, vector<8x32x32xf32> -> vector<8x32x32xf32>
    "tpu.trace_stop"() : () -> ()
    %cst_19 = arith.constant dense<0xFF800000> : vector<8x32xf32>
    %44 = vector.multi_reduction <maximumf>, %43, %cst_19 [2] : vector<8x32x32xf32> to vector<8x32xf32>
    %45 = vector.shape_cast %44 : vector<8x32xf32> to vector<8x32x1xf32>
    %46 = vector.broadcast %45 : vector<8x32x1xf32> to vector<8x32x32xf32>
    %47 = arith.subf %43, %46 : vector<8x32x32xf32>
    %48 = math.exp %47 : vector<8x32x32xf32>
    %cst_20 = arith.constant dense<0.000000e+00> : vector<8x32xf32>
    %49 = vector.multi_reduction <add>, %48, %cst_20 [2] : vector<8x32x32xf32> to vector<8x32xf32>
    %50 = vector.shape_cast %49 : vector<8x32xf32> to vector<8x32x1xf32>
    %51 = tpu.reciprocal %50 {approx = true} : vector<8x32x1xf32> -> vector<8x32x1xf32>
    %52 = vector.broadcast %51 : vector<8x32x1xf32> to vector<8x32x32xf32>
    %53 = arith.mulf %48, %52 : vector<8x32x32xf32>
    %54 = arith.truncf %53 : vector<8x32x32xf32> to vector<8x32x32xbf16>
    %55 = arith.truncf %42 : vector<8x32x8xf32> to vector<8x32x8xbf16>
    "tpu.trace_start"() <{level = 10 : i32, message = "bst,btd->bsd"}> : () -> ()
    %cst_21 = arith.constant dense<0.000000e+00> : vector<8x32x8xf32>
    %56 = tpu.matmul %54, %55, %cst_21 {dimension_numbers = #tpu.dot_dimension_numbers<[2], [1], [1], [2], [0, 0, 0, 1, 1, 2], [0], [0]>} : vector<8x32x32xbf16>, vector<8x32x8xbf16>, vector<8x32x8xf32> -> vector<8x32x8xf32>
    "tpu.trace_stop"() : () -> ()
    %57 = vector.shape_cast %56 : vector<8x32x8xf32> to vector<256x8xf32>
    %58 = tpu.concatenate %36, %57 in 1 : vector<256x8xf32>, vector<256x8xf32> -> vector<256x16xf32>
    %59 = arith.truncf %58 : vector<256x16xf32> to vector<256x16xbf16>
    %c0_22 = arith.constant 0 : index
    %c0_23 = arith.constant 0 : index
    %60 = vector.load %arg7[%c0_22, %c0_23] : memref<16x128xbf16, #tpu.memory_space<vmem>>, vector<16x128xbf16>
    %cst_24 = arith.constant dense<0.000000e+00> : vector<256x128xf32>
    %61 = tpu.matmul %59, %60, %cst_24 {dimension_numbers = #tpu.dot_dimension_numbers<[1], [0], [0], [1], [0, 0, 1, 1], [], []>} : vector<256x16xbf16>, vector<16x128xbf16>, vector<256x128xf32> -> vector<256x128xf32>
    %c0_25 = arith.constant 0 : index
    %c0_26 = arith.constant 0 : index
    %62 = vector.load %arg8[%c0_25, %c0_26] : memref<1x128xf32, #tpu.memory_space<vmem>>, vector<1x128xf32>
    %63 = vector.broadcast %62 : vector<1x128xf32> to vector<256x128xf32>
    %64 = arith.addf %61, %63 : vector<256x128xf32>
    %65 = vector.shape_cast %64 : vector<256x128xf32> to vector<8x32x128xf32>
    %c0_27 = arith.constant 0 : index
    %c0_28 = arith.constant 0 : index
    %c0_29 = arith.constant 0 : index
    %66 = vector.load %arg9[%c0_27, %c0_28, %c0_29] : memref<8x32x128xf32, #tpu.memory_space<vmem>>, vector<8x32x128xf32>
    tpu.vector_store %arg9[%c0_27, %c0_28, %c0_29], %65 {strides = array<i32>} : memref<8x32x128xf32, #tpu.memory_space<vmem>>, vector<8x32x128xf32>,
    return
  }
  func.func @transform_0(%arg0: i32) -> (i32, i32, i32) {
    %c0_i32 = arith.constant 0 : i32
    %c0_i32_0 = arith.constant 0 : i32
    %c0_i32_1 = arith.constant 0 : i32
    return %arg0, %c0_i32, %c0_i32_0 : i32, i32, i32
  }
  func.func @transform_1(%arg0: i32) -> (i32, i32, i32) {
    %c0_i32 = arith.constant 0 : i32
    %c0_i32_0 = arith.constant 0 : i32
    %c0_i32_1 = arith.constant 0 : i32
    return %arg0, %c0_i32, %c0_i32_0 : i32, i32, i32
  }
  func.func @transform_2(%arg0: i32) -> (i32, i32) {
    %c0_i32 = arith.constant 0 : i32
    %c0_i32_0 = arith.constant 0 : i32
    %c0_i32_1 = arith.constant 0 : i32
    return %c0_i32, %c0_i32_0 : i32, i32
  }
  func.func @transform_3(%arg0: i32) -> (i32, i32) {
    %c0_i32 = arith.constant 0 : i32
    %c0_i32_0 = arith.constant 0 : i32
    %c0_i32_1 = arith.constant 0 : i32
    return %c0_i32, %c0_i32_0 : i32, i32
  }
  func.func @transform_4(%arg0: i32) -> (i32, i32) {
    %c0_i32 = arith.constant 0 : i32
    %c0_i32_0 = arith.constant 0 : i32
    %c0_i32_1 = arith.constant 0 : i32
    return %c0_i32, %c0_i32_0 : i32, i32
  }
  func.func @transform_5(%arg0: i32) -> (i32, i32) {
    %c0_i32 = arith.constant 0 : i32
    %c0_i32_0 = arith.constant 0 : i32
    %c0_i32_1 = arith.constant 0 : i32
    return %c0_i32, %c0_i32_0 : i32, i32
  }
  func.func @transform_6(%arg0: i32) -> (i32, i32) {
    %c0_i32 = arith.constant 0 : i32
    %c0_i32_0 = arith.constant 0 : i32
    %c0_i32_1 = arith.constant 0 : i32
    return %c0_i32, %c0_i32_0 : i32, i32
  }
  func.func @transform_7(%arg0: i32) -> (i32, i32) {
    %c0_i32 = arith.constant 0 : i32
    %c0_i32_0 = arith.constant 0 : i32
    %c0_i32_1 = arith.constant 0 : i32
    return %c0_i32, %c0_i32_0 : i32, i32
  }
  func.func @transform_8(%arg0: i32) -> (i32, i32, i32) {
    %c0_i32 = arith.constant 0 : i32
    %c0_i32_0 = arith.constant 0 : i32
    %c0_i32_1 = arith.constant 0 : i32
    return %arg0, %c0_i32, %c0_i32_0 : i32, i32, i32
  }
}

</mosaic_0001>

<llo_original>
// kernel: tpu_custom_call.1
$region0: #{tpu_custom_call.1}
  #allocation0 [shape = 'u32[]', space=smem, size = 0x4, offset = 0x4, fixed_abs, tag = 'smem constant byte address 0x4 - core index']
  #allocation1 [shape = 'u32[72,128]{1,0:T(1,128)}', space=vmem, size = 0x9000, scoped, tag = 'internal scratch']
  %s0 = inlined_call_operand.hbm [shape: f32[8,32,128], index: 0, kind: input, shape index: {}]
  %s1 = inlined_call_operand.hbm [shape: f32[8,32,128], index: 1, kind: input, shape index: {}]
  %s2 = inlined_call_operand.vmem [shape: bf16[128,16], index: 2, kind: input, shape index: {}]
  %s3 = inlined_call_operand.vmem [shape: f32[1,16], index: 3, kind: input, shape index: {}]
  %s4 = inlined_call_operand.vmem [shape: bf16[128,32], index: 4, kind: input, shape index: {}]
  %s5 = inlined_call_operand.vmem [shape: f32[1,32], index: 5, kind: input, shape index: {}]
  %s6 = inlined_call_operand.vmem [shape: bf16[16,128], index: 6, kind: input, shape index: {}]
  %s7 = inlined_call_operand.vmem [shape: f32[1,128], index: 7, kind: input, shape index: {}]
  %s8 = inlined_call_operand.hbm [shape: f32[8,32,128], index: 8, kind: output, shape index: {}]
  %s9 = sld [smem:[#allocation0]]
  $region50: #{tpu_custom_call.1} parent=0
    _
  %s11 = ssub.s32 1, %s9
  %s12 = scalar_select 0, %s11, %s9
  $region1: #{tpu_custom_call.1} parent=0
    #allocation2 [shape = 'u8[131072]{0}', space=vmem, size = 0x20000, scoped, tag = 'input window, operand 0, single buffered']
    #allocation3 [shape = 's32[1]{0}', space=sflag, size = 0x4, scoped, tag = 'scoped memory for tpu_custom_call.1']
    #allocation4 [shape = 's32[1]{0}', space=sflag, size = 0x4, scoped, tag = 'scoped memory for tpu_custom_call.1']
    #allocation5 [shape = 'u8[131072]{0}', space=vmem, size = 0x20000, scoped, tag = 'input window, operand 1, single buffered']
    #allocation6 [shape = 's32[1]{0}', space=sflag, size = 0x4, scoped, tag = 'scoped memory for tpu_custom_call.1']
    #allocation7 [shape = 'u8[131072]{0}', space=vmem, size = 0x20000, scoped, tag = 'output window, operand 0, single buffered']
    %13 = vsyncpa [#allocation3], 0
    %14 = vsyncpa [#allocation6], 0
    %15 = vsyncpa [#allocation4], 0
    // Predicated region
    $region2: #{tpu_custom_call.1} parent=1 // pred_check
      _
    $region3: #{tpu_custom_call.1} parent=1 // pred_check_branch
      %17 = sbr.rel (0) target = $region5
    $region4: #{tpu_custom_call.1} parent=1 // pred_region
      %19 = vsyncadd [#allocation3], 0
      %s20 = sshll.u32 %s0, 4
      %s21 = int_to_ptr.hbm [resolvable:$true] %s20
      %s22 = sshll.u32 [#allocation2], 4
      %s23 = int_to_ptr.vmem [resolvable:$true] %s22
      %28 = dma.hbm_to_vmem [thread:$0]  %s21, 4096, %s23, [#allocation3], 128, 128, 8
    $region5: #{tpu_custom_call.1} parent=1 // pred_fallthru
      _
    // Predicated region
    $region6: #{tpu_custom_call.1} parent=1 // pred_check
      _
    $region7: #{tpu_custom_call.1} parent=1 // pred_check_branch
      %30 = sbr.rel (0) target = $region9
    $region8: #{tpu_custom_call.1} parent=1 // pred_region
      %32 = vsyncadd [#allocation6], 0
      %s33 = sshll.u32 %s1, 4
      %s34 = int_to_ptr.hbm [resolvable:$true] %s33
      %s35 = sshll.u32 [#allocation5], 4
      %s36 = int_to_ptr.vmem [resolvable:$true] %s35
      %41 = dma.hbm_to_vmem [thread:$0]  %s34, 4096, %s36, [#allocation6], 128, 128, 8
    $region9: #{tpu_custom_call.1} parent=1 // pred_fallthru
      _
    // Predicated region
    $region10: #{tpu_custom_call.1} parent=1 // pred_check
      _
    $region11: #{tpu_custom_call.1} parent=1 // pred_check_branch
      %43 = sbr.rel (0) target = $region13
    $region12: #{tpu_custom_call.1} parent=1 // pred_region
      _
    $region13: #{tpu_custom_call.1} parent=1 // pred_fallthru
      _
    // Predicated region
    $region14: #{tpu_custom_call.1} parent=1 // pred_check
      _
    $region15: #{tpu_custom_call.1} parent=1 // pred_check_branch
      %45 = sbr.rel (0) target = $region17
    $region16: #{tpu_custom_call.1} parent=1 // pred_region
      _
    $region17: #{tpu_custom_call.1} parent=1 // pred_fallthru
      _
    // Predicated region
    $region18: #{tpu_custom_call.1} parent=1 // pred_check
      _
    $region19: #{tpu_custom_call.1} parent=1 // pred_check_branch
      %47 = sbr.rel (0) target = $region21
    $region20: #{tpu_custom_call.1} parent=1 // pred_region
      _
    $region21: #{tpu_custom_call.1} parent=1 // pred_fallthru
      _
    // Predicated region
    $region22: #{tpu_custom_call.1} parent=1 // pred_check
      _
    $region23: #{tpu_custom_call.1} parent=1 // pred_check_branch
      %49 = sbr.rel (0) target = $region25
    $region24: #{tpu_custom_call.1} parent=1 // pred_region
      _
    $region25: #{tpu_custom_call.1} parent=1 // pred_fallthru
      _
    // Predicated region
    $region26: #{tpu_custom_call.1} parent=1 // pred_check
      _
    $region27: #{tpu_custom_call.1} parent=1 // pred_check_branch
      %51 = sbr.rel (0) target = $region29
    $region28: #{tpu_custom_call.1} parent=1 // pred_region
      _
    $region29: #{tpu_custom_call.1} parent=1 // pred_fallthru
      _
    // Predicated region
    $region30: #{tpu_custom_call.1} parent=1 // pred_check
      _
    $region31: #{tpu_custom_call.1} parent=1 // pred_check_branch
      %53 = sbr.rel (0) target = $region33
    $region32: #{tpu_custom_call.1} parent=1 // pred_region
      _
    $region33: #{tpu_custom_call.1} parent=1 // pred_fallthru
      _
    // Predicated region
    $region34: #{tpu_custom_call.1} parent=1 // pred_check
      _
    $region35: #{tpu_custom_call.1} parent=1 // pred_check_branch
      %55 = sbr.rel (0) target = $region37
    $region36: #{tpu_custom_call.1} parent=1 // pred_region
      %57 = dma.done [#allocation3], 4096
    $region37: #{tpu_custom_call.1} parent=1 // pred_fallthru
      _
    // Predicated region
    $region38: #{tpu_custom_call.1} parent=1 // pred_check
      _
    $region39: #{tpu_custom_call.1} parent=1 // pred_check_branch
      %59 = sbr.rel (0) target = $region41
    $region40: #{tpu_custom_call.1} parent=1 // pred_region
      %61 = dma.done [#allocation6], 4096
    $region41: #{tpu_custom_call.1} parent=1 // pred_fallthru
      _
    %v63 = vld [vmem:[#allocation2] sm:$0xff]
    %v64 = vld [vmem:[#allocation2 + $0x8] sm:$0xff]
    %v65 = vld [vmem:[#allocation2 + $0x10] sm:$0xff]
    %v66 = vld [vmem:[#allocation2 + $0x18] sm:$0xff]
    %v67 = vld [vmem:[#allocation2 + $0x20] sm:$0xff]
    %v68 = vld [vmem:[#allocation2 + $0x28] sm:$0xff]
    %v69 = vld [vmem:[#allocation2 + $0x30] sm:$0xff]
    %v70 = vld [vmem:[#allocation2 + $0x38] sm:$0xff]
    %v71 = vld [vmem:[#allocation2 + $0x40] sm:$0xff]
    %v72 = vld [vmem:[#allocation2 + $0x48] sm:$0xff]
    %v73 = vld [vmem:[#allocation2 + $0x50] sm:$0xff]
    %v74 = vld [vmem:[#allocation2 + $0x58] sm:$0xff]
    %v75 = vld [vmem:[#allocation2 + $0x60] sm:$0xff]
    %v76 = vld [vmem:[#allocation2 + $0x68] sm:$0xff]
    %v77 = vld [vmem:[#allocation2 + $0x70] sm:$0xff]
    %v78 = vld [vmem:[#allocation2 + $0x78] sm:$0xff]
    %v79 = vld [vmem:[#allocation2 + $0x80] sm:$0xff]
    %v80 = vld [vmem:[#allocation2 + $0x88] sm:$0xff]
    %v81 = vld [vmem:[#allocation2 + $0x90] sm:$0xff]
    %v82 = vld [vmem:[#allocation2 + $0x98] sm:$0xff]
    %v83 = vld [vmem:[#allocation2 + $0xa0] sm:$0xff]
    %v84 = vld [vmem:[#allocation2 + $0xa8] sm:$0xff]
    %v85 = vld [vmem:[#allocation2 + $0xb0] sm:$0xff]
    %v86 = vld [vmem:[#allocation2 + $0xb8] sm:$0xff]
    %v87 = vld [vmem:[#allocation2 + $0xc0] sm:$0xff]
    %v88 = vld [vmem:[#allocation2 + $0xc8] sm:$0xff]
    %v89 = vld [vmem:[#allocation2 + $0xd0] sm:$0xff]
    %v90 = vld [vmem:[#allocation2 + $0xd8] sm:$0xff]
    %v91 = vld [vmem:[#allocation2 + $0xe0] sm:$0xff]
    %v92 = vld [vmem:[#allocation2 + $0xe8] sm:$0xff]
    %v93 = vld [vmem:[#allocation2 + $0xf0] sm:$0xff]
    %v94 = vld [vmem:[#allocation2 + $0xf8] sm:$0xff]
    %v95 = vpack.c.bf16 %v64, %v63
    %v96 = vpack.c.bf16 %v66, %v65
    %v97 = vpack.c.bf16 %v68, %v67
    %v98 = vpack.c.bf16 %v70, %v69
    %v99 = vpack.c.bf16 %v72, %v71
    %v100 = vpack.c.bf16 %v74, %v73
    %v101 = vpack.c.bf16 %v76, %v75
    %v102 = vpack.c.bf16 %v78, %v77
    %v103 = vpack.c.bf16 %v80, %v79
    %v104 = vpack.c.bf16 %v82, %v81
    %v105 = vpack.c.bf16 %v84, %v83
    %v106 = vpack.c.bf16 %v86, %v85
    %v107 = vpack.c.bf16 %v88, %v87
    %v108 = vpack.c.bf16 %v90, %v89
    %v109 = vpack.c.bf16 %v92, %v91
    %v110 = vpack.c.bf16 %v94, %v93
    %v111 = vld [vmem:[#allocation5] sm:$0xff]
    %v112 = vld [vmem:[#allocation5 + $0x8] sm:$0xff]
    %v113 = vld [vmem:[#allocation5 + $0x10] sm:$0xff]
    %v114 = vld [vmem:[#allocation5 + $0x18] sm:$0xff]
    %v115 = vld [vmem:[#allocation5 + $0x20] sm:$0xff]
    %v116 = vld [vmem:[#allocation5 + $0x28] sm:$0xff]
    %v117 = vld [vmem:[#allocation5 + $0x30] sm:$0xff]
    %v118 = vld [vmem:[#allocation5 + $0x38] sm:$0xff]
    %v119 = vld [vmem:[#allocation5 + $0x40] sm:$0xff]
    %v120 = vld [vmem:[#allocation5 + $0x48] sm:$0xff]
    %v121 = vld [vmem:[#allocation5 + $0x50] sm:$0xff]
    %v122 = vld [vmem:[#allocation5 + $0x58] sm:$0xff]
    %v123 = vld [vmem:[#allocation5 + $0x60] sm:$0xff]
    %v124 = vld [vmem:[#allocation5 + $0x68] sm:$0xff]
    %v125 = vld [vmem:[#allocation5 + $0x70] sm:$0xff]
    %v126 = vld [vmem:[#allocation5 + $0x78] sm:$0xff]
    %v127 = vld [vmem:[#allocation5 + $0x80] sm:$0xff]
    %v128 = vld [vmem:[#allocation5 + $0x88] sm:$0xff]
    %v129 = vld [vmem:[#allocation5 + $0x90] sm:$0xff]
    %v130 = vld [vmem:[#allocation5 + $0x98] sm:$0xff]
    %v131 = vld [vmem:[#allocation5 + $0xa0] sm:$0xff]
    %v132 = vld [vmem:[#allocation5 + $0xa8] sm:$0xff]
    %v133 = vld [vmem:[#allocation5 + $0xb0] sm:$0xff]
    %v134 = vld [vmem:[#allocation5 + $0xb8] sm:$0xff]
    %v135 = vld [vmem:[#allocation5 + $0xc0] sm:$0xff]
    %v136 = vld [vmem:[#allocation5 + $0xc8] sm:$0xff]
    %v137 = vld [vmem:[#allocation5 + $0xd0] sm:$0xff]
    %v138 = vld [vmem:[#allocation5 + $0xd8] sm:$0xff]
    %v139 = vld [vmem:[#allocation5 + $0xe0] sm:$0xff]
    %v140 = vld [vmem:[#allocation5 + $0xe8] sm:$0xff]
    %v141 = vld [vmem:[#allocation5 + $0xf0] sm:$0xff]
    %v142 = vld [vmem:[#allocation5 + $0xf8] sm:$0xff]
    %v143 = vpack.c.bf16 %v112, %v111
    %v144 = vpack.c.bf16 %v114, %v113
    %v145 = vpack.c.bf16 %v116, %v115
    %v146 = vpack.c.bf16 %v118, %v117
    %v147 = vpack.c.bf16 %v120, %v119
    %v148 = vpack.c.bf16 %v122, %v121
    %v149 = vpack.c.bf16 %v124, %v123
    %v150 = vpack.c.bf16 %v126, %v125
    %v151 = vpack.c.bf16 %v128, %v127
    %v152 = vpack.c.bf16 %v130, %v129
    %v153 = vpack.c.bf16 %v132, %v131
    %v154 = vpack.c.bf16 %v134, %v133
    %v155 = vpack.c.bf16 %v136, %v135
    %v156 = vpack.c.bf16 %v138, %v137
    %v157 = vpack.c.bf16 %v140, %v139
    %v158 = vpack.c.bf16 %v142, %v141
    %v159 = vld [vmem:[%s2] sm:$0xf]
    %v160 = vld [vmem:[%s2 + $0x4] sm:$0xf]
    %v161 = vld [vmem:[%s2 + $0x8] sm:$0xf]
    %v162 = vld [vmem:[%s2 + $0xc] sm:$0xf]
    %v163 = vld [vmem:[%s2 + $0x10] sm:$0xf]
    %v164 = vld [vmem:[%s2 + $0x14] sm:$0xf]
    %v165 = vld [vmem:[%s2 + $0x18] sm:$0xf]
    %v166 = vld [vmem:[%s2 + $0x1c] sm:$0xf]
    %v167 = vld [vmem:[%s2 + $0x20] sm:$0xf]
    %v168 = vld [vmem:[%s2 + $0x24] sm:$0xf]
    %v169 = vld [vmem:[%s2 + $0x28] sm:$0xf]
    %v170 = vld [vmem:[%s2 + $0x2c] sm:$0xf]
    %v171 = vld [vmem:[%s2 + $0x30] sm:$0xf]
    %v172 = vld [vmem:[%s2 + $0x34] sm:$0xf]
    %v173 = vld [vmem:[%s2 + $0x38] sm:$0xf]
    %v174 = vld [vmem:[%s2 + $0x3c] sm:$0xf]
    %v175 = vld [vmem:[%s3] sm:$0x1]
    %v177 = vperm.slane %v175, 0
    %v195 = vunpack.c.l.b16 %v159
    %v196 = vunpack.c.l.b16 %v160
    %v197 = vunpack.c.l.b16 %v161
    %v198 = vunpack.c.l.b16 %v162
    %v199 = vunpack.c.l.b16 %v163
    %v200 = vunpack.c.l.b16 %v164
    %v201 = vunpack.c.l.b16 %v165
    %v202 = vunpack.c.l.b16 %v166
    %v203 = vunpack.c.l.b16 %v167
    %v204 = vunpack.c.l.b16 %v168
    %v205 = vunpack.c.l.b16 %v169
    %v206 = vunpack.c.l.b16 %v170
    %v207 = vunpack.c.l.b16 %v171
    %v208 = vunpack.c.l.b16 %v172
    %v209 = vunpack.c.l.b16 %v173
    %v210 = vunpack.c.l.b16 %v174
    %v211 = vpack.c.b16 %v196, %v195
    %v212 = vpack.c.b16 %v198, %v197
    %v213 = vpack.c.b16 %v200, %v199
    %v214 = vpack.c.b16 %v202, %v201
    %v215 = vpack.c.b16 %v204, %v203
    %v216 = vpack.c.b16 %v206, %v205
    %v217 = vpack.c.b16 %v208, %v207
    %v218 = vpack.c.b16 %v210, %v209
    %227 = vmatpush.bf16.msra.mxu0 %v218
    %228 = vmatpush.bf16.msra.mxu0 %v217
    %229 = vmatpush.bf16.msra.mxu0 %v216
    %230 = vmatpush.bf16.msra.mxu0 %v215
    %231 = vmatpush.bf16.msra.mxu0 %v214
    %232 = vmatpush.bf16.msra.mxu0 %v213
    %233 = vmatpush.bf16.msra.mxu0 %v212
    %234 = vmatpush.bf16.msra.mxu0 %v211
    %235 = vmatmul.bf16.gmra.mxu0 %v95
    %v236 = vpop.f32.mrf.mxu0
    %v237 = vadd.f32 %v177, %v236
    %v238 = vpop.f32.mrf.mxu0
    %v239 = vadd.f32 %v177, %v238
    %240 = vmatmul.bf16.gmra.mxu0 %v96
    %v241 = vpop.f32.mrf.mxu0
    %v242 = vadd.f32 %v177, %v241
    %v243 = vpop.f32.mrf.mxu0
    %v244 = vadd.f32 %v177, %v243
    %245 = vmatmul.bf16.gmra.mxu0 %v97
    %v246 = vpop.f32.mrf.mxu0
    %v247 = vadd.f32 %v177, %v246
    %v248 = vpop.f32.mrf.mxu0
    %v249 = vadd.f32 %v177, %v248
    %250 = vmatmul.bf16.gmra.mxu0 %v98
    %v251 = vpop.f32.mrf.mxu0
    %v252 = vadd.f32 %v177, %v251
    %v253 = vpop.f32.mrf.mxu0
    %v254 = vadd.f32 %v177, %v253
    %255 = vmatmul.bf16.gmra.mxu0 %v99
    %v256 = vpop.f32.mrf.mxu0
    %v257 = vadd.f32 %v177, %v256
    %v258 = vpop.f32.mrf.mxu0
    %v259 = vadd.f32 %v177, %v258
    %260 = vmatmul.bf16.gmra.mxu0 %v100
    %v261 = vpop.f32.mrf.mxu0
    %v262 = vadd.f32 %v177, %v261
    %v263 = vpop.f32.mrf.mxu0
    %v264 = vadd.f32 %v177, %v263
    %265 = vmatmul.bf16.gmra.mxu0 %v101
    %v266 = vpop.f32.mrf.mxu0
    %v267 = vadd.f32 %v177, %v266
    %v268 = vpop.f32.mrf.mxu0
    %v269 = vadd.f32 %v177, %v268
    %270 = vmatmul.bf16.gmra.mxu0 %v102
    %v271 = vpop.f32.mrf.mxu0
    %v272 = vadd.f32 %v177, %v271
    %v273 = vpop.f32.mrf.mxu0
    %v274 = vadd.f32 %v177, %v273
    %275 = vmatmul.bf16.gmra.mxu0 %v103
    %v276 = vpop.f32.mrf.mxu0
    %v277 = vadd.f32 %v177, %v276
    %v278 = vpop.f32.mrf.mxu0
    %v279 = vadd.f32 %v177, %v278
    %280 = vmatmul.bf16.gmra.mxu0 %v104
    %v281 = vpop.f32.mrf.mxu0
    %v282 = vadd.f32 %v177, %v281
    %v283 = vpop.f32.mrf.mxu0
    %v284 = vadd.f32 %v177, %v283
    %285 = vmatmul.bf16.gmra.mxu0 %v105
    %v286 = vpop.f32.mrf.mxu0
    %v287 = vadd.f32 %v177, %v286
    %v288 = vpop.f32.mrf.mxu0
    %v289 = vadd.f32 %v177, %v288
    %290 = vmatmul.bf16.gmra.mxu0 %v106
    %v291 = vpop.f32.mrf.mxu0
    %v292 = vadd.f32 %v177, %v291
    %v293 = vpop.f32.mrf.mxu0
    %v294 = vadd.f32 %v177, %v293
    %295 = vmatmul.bf16.gmra.mxu0 %v107
    %v296 = vpop.f32.mrf.mxu0
    %v297 = vadd.f32 %v177, %v296
    %v298 = vpop.f32.mrf.mxu0
    %v299 = vadd.f32 %v177, %v298
    %300 = vmatmul.bf16.gmra.mxu0 %v108
    %v301 = vpop.f32.mrf.mxu0
    %v302 = vadd.f32 %v177, %v301
    %v303 = vpop.f32.mrf.mxu0
    %v304 = vadd.f32 %v177, %v303
    %305 = vmatmul.bf16.gmra.mxu0 %v109
    %v306 = vpop.f32.mrf.mxu0
    %v307 = vadd.f32 %v177, %v306
    %v308 = vpop.f32.mrf.mxu0
    %v309 = vadd.f32 %v177, %v308
    %310 = vmatmul.bf16.gmra.mxu0 %v110
    %v311 = vpop.f32.mrf.mxu0
    %v312 = vadd.f32 %v177, %v311
    %v313 = vpop.f32.mrf.mxu0
    %v314 = vadd.f32 %v177, %v313
    %315 = vdwg.mxu0
    %v316 = vld [vmem:[%s4] sm:$0xf]
    %v317 = vld [vmem:[%s4 + $0x4] sm:$0xf]
    %v318 = vld [vmem:[%s4 + $0x8] sm:$0xf]
    %v319 = vld [vmem:[%s4 + $0xc] sm:$0xf]
    %v320 = vld [vmem:[%s4 + $0x10] sm:$0xf]
    %v321 = vld [vmem:[%s4 + $0x14] sm:$0xf]
    %v322 = vld [vmem:[%s4 + $0x18] sm:$0xf]
    %v323 = vld [vmem:[%s4 + $0x1c] sm:$0xf]
    %v324 = vld [vmem:[%s4 + $0x20] sm:$0xf]
    %v325 = vld [vmem:[%s4 + $0x24] sm:$0xf]
    %v326 = vld [vmem:[%s4 + $0x28] sm:$0xf]
    %v327 = vld [vmem:[%s4 + $0x2c] sm:$0xf]
    %v328 = vld [vmem:[%s4 + $0x30] sm:$0xf]
    %v329 = vld [vmem:[%s4 + $0x34] sm:$0xf]
    %v330 = vld [vmem:[%s4 + $0x38] sm:$0xf]
    %v331 = vld [vmem:[%s4 + $0x3c] sm:$0xf]
    %v332 = vld [vmem:[%s5] sm:$0x1]
    %v334 = vperm.slane %v332, 0
    %v352 = vunpack.c.l.b16 %v316
    %v353 = vunpack.c.l.b16 %v317
    %v354 = vunpack.c.l.b16 %v318
    %v355 = vunpack.c.l.b16 %v319
    %v356 = vunpack.c.l.b16 %v320
    %v357 = vunpack.c.l.b16 %v321
    %v358 = vunpack.c.l.b16 %v322
    %v359 = vunpack.c.l.b16 %v323
    %v360 = vunpack.c.l.b16 %v324
    %v361 = vunpack.c.l.b16 %v325
    %v362 = vunpack.c.l.b16 %v326
    %v363 = vunpack.c.l.b16 %v327
    %v364 = vunpack.c.l.b16 %v328
    %v365 = vunpack.c.l.b16 %v329
    %v366 = vunpack.c.l.b16 %v330
    %v367 = vunpack.c.l.b16 %v331
    %v368 = vpack.c.b16 %v353, %v352
    %v369 = vpack.c.b16 %v355, %v354
    %v370 = vpack.c.b16 %v357, %v356
    %v371 = vpack.c.b16 %v359, %v358
    %v372 = vpack.c.b16 %v361, %v360
    %v373 = vpack.c.b16 %v363, %v362
    %v374 = vpack.c.b16 %v365, %v364
    %v375 = vpack.c.b16 %v367, %v366
    %384 = vmatpush.bf16.msra.mxu0 %v375
    %385 = vmatpush.bf16.msra.mxu0 %v374
    %386 = vmatpush.bf16.msra.mxu0 %v373
    %387 = vmatpush.bf16.msra.mxu0 %v372
    %388 = vmatpush.bf16.msra.mxu0 %v371
    %389 = vmatpush.bf16.msra.mxu0 %v370
    %390 = vmatpush.bf16.msra.mxu0 %v369
    %391 = vmatpush.bf16.msra.mxu0 %v368
    %392 = vmatmul.bf16.gmra.mxu0 %v143
    %v393 = vpop.f32.mrf.mxu0
    %v394 = vadd.f32 %v334, %v393
    %v395 = vpop.f32.mrf.mxu0
    %v396 = vadd.f32 %v334, %v395
    %397 = vmatmul.bf16.gmra.mxu0 %v144
    %v398 = vpop.f32.mrf.mxu0
    %v399 = vadd.f32 %v334, %v398
    %v400 = vpop.f32.mrf.mxu0
    %v401 = vadd.f32 %v334, %v400
    %402 = vmatmul.bf16.gmra.mxu0 %v145
    %v403 = vpop.f32.mrf.mxu0
    %v404 = vadd.f32 %v334, %v403
    %v405 = vpop.f32.mrf.mxu0
    %v406 = vadd.f32 %v334, %v405
    %407 = vmatmul.bf16.gmra.mxu0 %v146
    %v408 = vpop.f32.mrf.mxu0
    %v409 = vadd.f32 %v334, %v408
    %v410 = vpop.f32.mrf.mxu0
    %v411 = vadd.f32 %v334, %v410
    %412 = vmatmul.bf16.gmra.mxu0 %v147
    %v413 = vpop.f32.mrf.mxu0
    %v414 = vadd.f32 %v334, %v413
    %v415 = vpop.f32.mrf.mxu0
    %v416 = vadd.f32 %v334, %v415
    %417 = vmatmul.bf16.gmra.mxu0 %v148
    %v418 = vpop.f32.mrf.mxu0
    %v419 = vadd.f32 %v334, %v418
    %v420 = vpop.f32.mrf.mxu0
    %v421 = vadd.f32 %v334, %v420
    %422 = vmatmul.bf16.gmra.mxu0 %v149
    %v423 = vpop.f32.mrf.mxu0
    %v424 = vadd.f32 %v334, %v423
    %v425 = vpop.f32.mrf.mxu0
    %v426 = vadd.f32 %v334, %v425
    %427 = vmatmul.bf16.gmra.mxu0 %v150
    %v428 = vpop.f32.mrf.mxu0
    %v429 = vadd.f32 %v334, %v428
    %v430 = vpop.f32.mrf.mxu0
    %v431 = vadd.f32 %v334, %v430
    %432 = vmatmul.bf16.gmra.mxu0 %v151
    %v433 = vpop.f32.mrf.mxu0
    %v434 = vadd.f32 %v334, %v433
    %v435 = vpop.f32.mrf.mxu0
    %v436 = vadd.f32 %v334, %v435
    %437 = vmatmul.bf16.gmra.mxu0 %v152
    %v438 = vpop.f32.mrf.mxu0
    %v439 = vadd.f32 %v334, %v438
    %v440 = vpop.f32.mrf.mxu0
    %v441 = vadd.f32 %v334, %v440
    %442 = vmatmul.bf16.gmra.mxu0 %v153
    %v443 = vpop.f32.mrf.mxu0
    %v444 = vadd.f32 %v334, %v443
    %v445 = vpop.f32.mrf.mxu0
    %v446 = vadd.f32 %v334, %v445
    %447 = vmatmul.bf16.gmra.mxu0 %v154
    %v448 = vpop.f32.mrf.mxu0
    %v449 = vadd.f32 %v334, %v448
    %v450 = vpop.f32.mrf.mxu0
    %v451 = vadd.f32 %v334, %v450
    %452 = vmatmul.bf16.gmra.mxu0 %v155
    %v453 = vpop.f32.mrf.mxu0
    %v454 = vadd.f32 %v334, %v453
    %v455 = vpop.f32.mrf.mxu0
    %v456 = vadd.f32 %v334, %v455
    %457 = vmatmul.bf16.gmra.mxu0 %v156
    %v458 = vpop.f32.mrf.mxu0
    %v459 = vadd.f32 %v334, %v458
    %v460 = vpop.f32.mrf.mxu0
    %v461 = vadd.f32 %v334, %v460
    %462 = vmatmul.bf16.gmra.mxu0 %v157
    %v463 = vpop.f32.mrf.mxu0
    %v464 = vadd.f32 %v334, %v463
    %v465 = vpop.f32.mrf.mxu0
    %v466 = vadd.f32 %v334, %v465
    %467 = vmatmul.bf16.gmra.mxu0 %v158
    %v468 = vpop.f32.mrf.mxu0
    %v469 = vadd.f32 %v334, %v468
    %v470 = vpop.f32.mrf.mxu0
    %v471 = vadd.f32 %v334, %v470
    %472 = vdwg.mxu0
    %vm473 = vcmask 64512
    %v475 = vsel %vm473, %v237, 0
    %v478 = vsel %vm473, %v239, 0
    %v481 = vsel %vm473, %v242, 0
    %v484 = vsel %vm473, %v244, 0
    %v487 = vsel %vm473, %v394, 0
    %v490 = vsel %vm473, %v396, 0
    %v493 = vsel %vm473, %v399, 0
    %v496 = vsel %vm473, %v401, 0
    %498 = vmatpush.xpose.msra.mxu0 0.0
    %499 = vmatpush.xpose.msra.mxu0 0.0
    %500 = vmatpush.xpose.msra.mxu0 0.0
    %501 = vmatpush.xpose.msra.mxu0 0.0
    %502 = vmatpush.xpose.msra.mxu0 0.0
    %503 = vmatpush.xpose.msra.mxu0 0.0
    %504 = vmatpush.xpose.msra.mxu0 0.0
    %505 = vmatpush.xpose.msra.mxu0 0.0
    %506 = vmatpush.xpose.msra.mxu0 0.0
    %507 = vmatpush.xpose.msra.mxu0 0.0
    %508 = vmatpush.xpose.msra.mxu0 0.0
    %509 = vmatpush.xpose.msra.mxu0 0.0
    %510 = vmatpush.xpose.msra.mxu0 %v496
    %511 = vmatpush.xpose.msra.mxu0 %v493
    %512 = vmatpush.xpose.msra.mxu0 %v490
    %513 = vmatpush.xpose.msra.mxu0 %v487
    %514 = vmatmul.f32.gmra.mxu0 %v475
    %v515 = vpop.f32.mrf.mxu0
    %v516 = vadd.f32 0.0, %v515
    %517 = vmatmul.f32.gmra.mxu0 %v478
    %v518 = vpop.f32.mrf.mxu0
    %v519 = vadd.f32 0.0, %v518
    %520 = vmatmul.f32.gmra.mxu0 %v481
    %v521 = vpop.f32.mrf.mxu0
    %v522 = vadd.f32 0.0, %v521
    %523 = vmatmul.f32.gmra.mxu0 %v484
    %v524 = vpop.f32.mrf.mxu0
    %v525 = vadd.f32 0.0, %v524
    %526 = vdwg.mxu0
    %v528 = vsel %vm473, %v247, 0
    %v531 = vsel %vm473, %v249, 0
    %v534 = vsel %vm473, %v252, 0
    %v537 = vsel %vm473, %v254, 0
    %v540 = vsel %vm473, %v404, 0
    %v543 = vsel %vm473, %v406, 0
    %v546 = vsel %vm473, %v409, 0
    %v549 = vsel %vm473, %v411, 0
    %551 = vmatpush.xpose.msra.mxu0 0.0
    %552 = vmatpush.xpose.msra.mxu0 0.0
    %553 = vmatpush.xpose.msra.mxu0 0.0
    %554 = vmatpush.xpose.msra.mxu0 0.0
    %555 = vmatpush.xpose.msra.mxu0 0.0
    %556 = vmatpush.xpose.msra.mxu0 0.0
    %557 = vmatpush.xpose.msra.mxu0 0.0
    %558 = vmatpush.xpose.msra.mxu0 0.0
    %559 = vmatpush.xpose.msra.mxu0 0.0
    %560 = vmatpush.xpose.msra.mxu0 0.0
    %561 = vmatpush.xpose.msra.mxu0 0.0
    %562 = vmatpush.xpose.msra.mxu0 0.0
    %563 = vmatpush.xpose.msra.mxu0 %v549
    %564 = vmatpush.xpose.msra.mxu0 %v546
    %565 = vmatpush.xpose.msra.mxu0 %v543
    %566 = vmatpush.xpose.msra.mxu0 %v540
    %567 = vmatmul.f32.gmra.mxu0 %v528
    %v568 = vpop.f32.mrf.mxu0
    %v569 = vadd.f32 0.0, %v568
    %570 = vmatmul.f32.gmra.mxu0 %v531
    %v571 = vpop.f32.mrf.mxu0
    %v572 = vadd.f32 0.0, %v571
    %573 = vmatmul.f32.gmra.mxu0 %v534
    %v574 = vpop.f32.mrf.mxu0
    %v575 = vadd.f32 0.0, %v574
    %576 = vmatmul.f32.gmra.mxu0 %v537
    %v577 = vpop.f32.mrf.mxu0
    %v578 = vadd.f32 0.0, %v577
    %579 = vdwg.mxu0
    %v581 = vsel %vm473, %v257, 0
    %v584 = vsel %vm473, %v259, 0
    %v587 = vsel %vm473, %v262, 0
    %v590 = vsel %vm473, %v264, 0
    %v593 = vsel %vm473, %v414, 0
    %v596 = vsel %vm473, %v416, 0
    %v599 = vsel %vm473, %v419, 0
    %v602 = vsel %vm473, %v421, 0
    %604 = vmatpush.xpose.msra.mxu0 0.0
    %605 = vmatpush.xpose.msra.mxu0 0.0
    %606 = vmatpush.xpose.msra.mxu0 0.0
    %607 = vmatpush.xpose.msra.mxu0 0.0
    %608 = vmatpush.xpose.msra.mxu0 0.0
    %609 = vmatpush.xpose.msra.mxu0 0.0
    %610 = vmatpush.xpose.msra.mxu0 0.0
    %611 = vmatpush.xpose.msra.mxu0 0.0
    %612 = vmatpush.xpose.msra.mxu0 0.0
    %613 = vmatpush.xpose.msra.mxu0 0.0
    %614 = vmatpush.xpose.msra.mxu0 0.0
    %615 = vmatpush.xpose.msra.mxu0 0.0
    %616 = vmatpush.xpose.msra.mxu0 %v602
    %617 = vmatpush.xpose.msra.mxu0 %v599
    %618 = vmatpush.xpose.msra.mxu0 %v596
    %619 = vmatpush.xpose.msra.mxu0 %v593
    %620 = vmatmul.f32.gmra.mxu0 %v581
    %v621 = vpop.f32.mrf.mxu0
    %v622 = vadd.f32 0.0, %v621
    %623 = vmatmul.f32.gmra.mxu0 %v584
    %v624 = vpop.f32.mrf.mxu0
    %v625 = vadd.f32 0.0, %v624
    %626 = vmatmul.f32.gmra.mxu0 %v587
    %v627 = vpop.f32.mrf.mxu0
    %v628 = vadd.f32 0.0, %v627
    %629 = vmatmul.f32.gmra.mxu0 %v590
    %v630 = vpop.f32.mrf.mxu0
    %v631 = vadd.f32 0.0, %v630
    %632 = vdwg.mxu0
    %v634 = vsel %vm473, %v267, 0
    %v637 = vsel %vm473, %v269, 0
    %v640 = vsel %vm473, %v272, 0
    %v643 = vsel %vm473, %v274, 0
    %v646 = vsel %vm473, %v424, 0
    %v649 = vsel %vm473, %v426, 0
    %v652 = vsel %vm473, %v429, 0
    %v655 = vsel %vm473, %v431, 0
    %657 = vmatpush.xpose.msra.mxu0 0.0
    %658 = vmatpush.xpose.msra.mxu0 0.0
    %659 = vmatpush.xpose.msra.mxu0 0.0
    %660 = vmatpush.xpose.msra.mxu0 0.0
    %661 = vmatpush.xpose.msra.mxu0 0.0
    %662 = vmatpush.xpose.msra.mxu0 0.0
    %663 = vmatpush.xpose.msra.mxu0 0.0
    %664 = vmatpush.xpose.msra.mxu0 0.0
    %665 = vmatpush.xpose.msra.mxu0 0.0
    %666 = vmatpush.xpose.msra.mxu0 0.0
    %667 = vmatpush.xpose.msra.mxu0 0.0
    %668 = vmatpush.xpose.msra.mxu0 0.0
    %669 = vmatpush.xpose.msra.mxu0 %v655
    %670 = vmatpush.xpose.msra.mxu0 %v652
    %671 = vmatpush.xpose.msra.mxu0 %v649
    %672 = vmatpush.xpose.msra.mxu0 %v646
    %673 = vmatmul.f32.gmra.mxu0 %v634
    %v674 = vpop.f32.mrf.mxu0
    %v675 = vadd.f32 0.0, %v674
    %676 = vmatmul.f32.gmra.mxu0 %v637
    %v677 = vpop.f32.mrf.mxu0
    %v678 = vadd.f32 0.0, %v677
    %679 = vmatmul.f32.gmra.mxu0 %v640
    %v680 = vpop.f32.mrf.mxu0
    %v681 = vadd.f32 0.0, %v680
    %682 = vmatmul.f32.gmra.mxu0 %v643
    %v683 = vpop.f32.mrf.mxu0
    %v684 = vadd.f32 0.0, %v683
    %685 = vdwg.mxu0
    %v687 = vsel %vm473, %v277, 0
    %v690 = vsel %vm473, %v279, 0
    %v693 = vsel %vm473, %v282, 0
    %v696 = vsel %vm473, %v284, 0
    %v699 = vsel %vm473, %v434, 0
    %v702 = vsel %vm473, %v436, 0
    %v705 = vsel %vm473, %v439, 0
    %v708 = vsel %vm473, %v441, 0
    %710 = vmatpush.xpose.msra.mxu0 0.0
    %711 = vmatpush.xpose.msra.mxu0 0.0
    %712 = vmatpush.xpose.msra.mxu0 0.0
    %713 = vmatpush.xpose.msra.mxu0 0.0
    %714 = vmatpush.xpose.msra.mxu0 0.0
    %715 = vmatpush.xpose.msra.mxu0 0.0
    %716 = vmatpush.xpose.msra.mxu0 0.0
    %717 = vmatpush.xpose.msra.mxu0 0.0
    %718 = vmatpush.xpose.msra.mxu0 0.0
    %719 = vmatpush.xpose.msra.mxu0 0.0
    %720 = vmatpush.xpose.msra.mxu0 0.0
    %721 = vmatpush.xpose.msra.mxu0 0.0
    %722 = vmatpush.xpose.msra.mxu0 %v708
    %723 = vmatpush.xpose.msra.mxu0 %v705
    %724 = vmatpush.xpose.msra.mxu0 %v702
    %725 = vmatpush.xpose.msra.mxu0 %v699
    %726 = vmatmul.f32.gmra.mxu0 %v687
    %v727 = vpop.f32.mrf.mxu0
    %v728 = vadd.f32 0.0, %v727
    %729 = vmatmul.f32.gmra.mxu0 %v690
    %v730 = vpop.f32.mrf.mxu0
    %v731 = vadd.f32 0.0, %v730
    %732 = vmatmul.f32.gmra.mxu0 %v693
    %v733 = vpop.f32.mrf.mxu0
    %v734 = vadd.f32 0.0, %v733
    %735 = vmatmul.f32.gmra.mxu0 %v696
    %v736 = vpop.f32.mrf.mxu0
    %v737 = vadd.f32 0.0, %v736
    %738 = vdwg.mxu0
    %v740 = vsel %vm473, %v287, 0
    %v743 = vsel %vm473, %v289, 0
    %v746 = vsel %vm473, %v292, 0
    %v749 = vsel %vm473, %v294, 0
    %v752 = vsel %vm473, %v444, 0
    %v755 = vsel %vm473, %v446, 0
    %v758 = vsel %vm473, %v449, 0
    %v761 = vsel %vm473, %v451, 0
    %763 = vmatpush.xpose.msra.mxu0 0.0
    %764 = vmatpush.xpose.msra.mxu0 0.0
    %765 = vmatpush.xpose.msra.mxu0 0.0
    %766 = vmatpush.xpose.msra.mxu0 0.0
    %767 = vmatpush.xpose.msra.mxu0 0.0
    %768 = vmatpush.xpose.msra.mxu0 0.0
    %769 = vmatpush.xpose.msra.mxu0 0.0
    %770 = vmatpush.xpose.msra.mxu0 0.0
    %771 = vmatpush.xpose.msra.mxu0 0.0
    %772 = vmatpush.xpose.msra.mxu0 0.0
    %773 = vmatpush.xpose.msra.mxu0 0.0
    %774 = vmatpush.xpose.msra.mxu0 0.0
    %775 = vmatpush.xpose.msra.mxu0 %v761
    %776 = vmatpush.xpose.msra.mxu0 %v758
    %777 = vmatpush.xpose.msra.mxu0 %v755
    %778 = vmatpush.xpose.msra.mxu0 %v752
    %779 = vmatmul.f32.gmra.mxu0 %v740
    %v780 = vpop.f32.mrf.mxu0
    %v781 = vadd.f32 0.0, %v780
    %782 = vmatmul.f32.gmra.mxu0 %v743
    %v783 = vpop.f32.mrf.mxu0
    %v784 = vadd.f32 0.0, %v783
    %785 = vmatmul.f32.gmra.mxu0 %v746
    %v786 = vpop.f32.mrf.mxu0
    %v787 = vadd.f32 0.0, %v786
    %788 = vmatmul.f32.gmra.mxu0 %v749
    %v789 = vpop.f32.mrf.mxu0
    %v790 = vadd.f32 0.0, %v789
    %791 = vdwg.mxu0
    %v793 = vsel %vm473, %v297, 0
    %v796 = vsel %vm473, %v299, 0
    %v799 = vsel %vm473, %v302, 0
    %v802 = vsel %vm473, %v304, 0
    %v805 = vsel %vm473, %v454, 0
    %v808 = vsel %vm473, %v456, 0
    %v811 = vsel %vm473, %v459, 0
    %v814 = vsel %vm473, %v461, 0
    %816 = vmatpush.xpose.msra.mxu0 0.0
    %817 = vmatpush.xpose.msra.mxu0 0.0
    %818 = vmatpush.xpose.msra.mxu0 0.0
    %819 = vmatpush.xpose.msra.mxu0 0.0
    %820 = vmatpush.xpose.msra.mxu0 0.0
    %821 = vmatpush.xpose.msra.mxu0 0.0
    %822 = vmatpush.xpose.msra.mxu0 0.0
    %823 = vmatpush.xpose.msra.mxu0 0.0
    %824 = vmatpush.xpose.msra.mxu0 0.0
    %825 = vmatpush.xpose.msra.mxu0 0.0
    %826 = vmatpush.xpose.msra.mxu0 0.0
    %827 = vmatpush.xpose.msra.mxu0 0.0
    %828 = vmatpush.xpose.msra.mxu0 %v814
    %829 = vmatpush.xpose.msra.mxu0 %v811
    %830 = vmatpush.xpose.msra.mxu0 %v808
    %831 = vmatpush.xpose.msra.mxu0 %v805
    %832 = vmatmul.f32.gmra.mxu0 %v793
    %v833 = vpop.f32.mrf.mxu0
    %v834 = vadd.f32 0.0, %v833
    %835 = vmatmul.f32.gmra.mxu0 %v796
    %v836 = vpop.f32.mrf.mxu0
    %v837 = vadd.f32 0.0, %v836
    %838 = vmatmul.f32.gmra.mxu0 %v799
    %v839 = vpop.f32.mrf.mxu0
    %v840 = vadd.f32 0.0, %v839
    %841 = vmatmul.f32.gmra.mxu0 %v802
    %v842 = vpop.f32.mrf.mxu0
    %v843 = vadd.f32 0.0, %v842
    %844 = vdwg.mxu0
    %v846 = vsel %vm473, %v307, 0
    %v849 = vsel %vm473, %v309, 0
    %v852 = vsel %vm473, %v312, 0
    %v855 = vsel %vm473, %v314, 0
    %v858 = vsel %vm473, %v464, 0
    %v861 = vsel %vm473, %v466, 0
    %v864 = vsel %vm473, %v469, 0
    %v867 = vsel %vm473, %v471, 0
    %869 = vmatpush.xpose.msra.mxu0 0.0
    %870 = vmatpush.xpose.msra.mxu0 0.0
    %871 = vmatpush.xpose.msra.mxu0 0.0
    %872 = vmatpush.xpose.msra.mxu0 0.0
    %873 = vmatpush.xpose.msra.mxu0 0.0
    %874 = vmatpush.xpose.msra.mxu0 0.0
    %875 = vmatpush.xpose.msra.mxu0 0.0
    %876 = vmatpush.xpose.msra.mxu0 0.0
    %877 = vmatpush.xpose.msra.mxu0 0.0
    %878 = vmatpush.xpose.msra.mxu0 0.0
    %879 = vmatpush.xpose.msra.mxu0 0.0
    %880 = vmatpush.xpose.msra.mxu0 0.0
    %881 = vmatpush.xpose.msra.mxu0 %v867
    %882 = vmatpush.xpose.msra.mxu0 %v864
    %883 = vmatpush.xpose.msra.mxu0 %v861
    %884 = vmatpush.xpose.msra.mxu0 %v858
    %885 = vmatmul.f32.gmra.mxu0 %v846
    %v886 = vpop.f32.mrf.mxu0
    %v887 = vadd.f32 0.0, %v886
    %888 = vmatmul.f32.gmra.mxu0 %v849
    %v889 = vpop.f32.mrf.mxu0
    %v890 = vadd.f32 0.0, %v889
    %891 = vmatmul.f32.gmra.mxu0 %v852
    %v892 = vpop.f32.mrf.mxu0
    %v893 = vadd.f32 0.0, %v892
    %894 = vmatmul.f32.gmra.mxu0 %v855
    %v895 = vpop.f32.mrf.mxu0
    %v896 = vadd.f32 0.0, %v895
    %897 = vdwg.mxu0
    %vm898 = vcmask 261120
    %v899 = vsel %vm898, %v516, -inf
    %900 = vmax.xlane.f32.xlu0 %v899
    %v901 = vpop.xlane.xlu0 %900
    %v902 = vsel %vm898, %v519, -inf
    %903 = vmax.xlane.f32.xlu0 %v902
    %v904 = vpop.xlane.xlu0 %903
    %v905 = vsel %vm898, %v522, -inf
    %906 = vmax.xlane.f32.xlu0 %v905
    %v907 = vpop.xlane.xlu0 %906
    %v908 = vsel %vm898, %v525, -inf
    %909 = vmax.xlane.f32.xlu0 %v908
    %v910 = vpop.xlane.xlu0 %909
    %v911 = vsel %vm898, %v569, -inf
    %912 = vmax.xlane.f32.xlu0 %v911
    %v913 = vpop.xlane.xlu0 %912
    %v914 = vsel %vm898, %v572, -inf
    %915 = vmax.xlane.f32.xlu0 %v914
    %v916 = vpop.xlane.xlu0 %915
    %v917 = vsel %vm898, %v575, -inf
    %918 = vmax.xlane.f32.xlu0 %v917
    %v919 = vpop.xlane.xlu0 %918
    %v920 = vsel %vm898, %v578, -inf
    %921 = vmax.xlane.f32.xlu0 %v920
    %v922 = vpop.xlane.xlu0 %921
    %v923 = vsel %vm898, %v622, -inf
    %924 = vmax.xlane.f32.xlu0 %v923
    %v925 = vpop.xlane.xlu0 %924
    %v926 = vsel %vm898, %v625, -inf
    %927 = vmax.xlane.f32.xlu0 %v926
    %v928 = vpop.xlane.xlu0 %927
    %v929 = vsel %vm898, %v628, -inf
    %930 = vmax.xlane.f32.xlu0 %v929
    %v931 = vpop.xlane.xlu0 %930
    %v932 = vsel %vm898, %v631, -inf
    %933 = vmax.xlane.f32.xlu0 %v932
    %v934 = vpop.xlane.xlu0 %933
    %v935 = vsel %vm898, %v675, -inf
    %936 = vmax.xlane.f32.xlu0 %v935
    %v937 = vpop.xlane.xlu0 %936
    %v938 = vsel %vm898, %v678, -inf
    %939 = vmax.xlane.f32.xlu0 %v938
    %v940 = vpop.xlane.xlu0 %939
    %v941 = vsel %vm898, %v681, -inf
    %942 = vmax.xlane.f32.xlu0 %v941
    %v943 = vpop.xlane.xlu0 %942
    %v944 = vsel %vm898, %v684, -inf
    %945 = vmax.xlane.f32.xlu0 %v944
    %v946 = vpop.xlane.xlu0 %945
    %v947 = vsel %vm898, %v728, -inf
    %948 = vmax.xlane.f32.xlu0 %v947
    %v949 = vpop.xlane.xlu0 %948
    %v950 = vsel %vm898, %v731, -inf
    %951 = vmax.xlane.f32.xlu0 %v950
    %v952 = vpop.xlane.xlu0 %951
    %v953 = vsel %vm898, %v734, -inf
    %954 = vmax.xlane.f32.xlu0 %v953
    %v955 = vpop.xlane.xlu0 %954
    %v956 = vsel %vm898, %v737, -inf
    %957 = vmax.xlane.f32.xlu0 %v956
    %v958 = vpop.xlane.xlu0 %957
    %v959 = vsel %vm898, %v781, -inf
    %960 = vmax.xlane.f32.xlu0 %v959
    %v961 = vpop.xlane.xlu0 %960
    %v962 = vsel %vm898, %v784, -inf
    %963 = vmax.xlane.f32.xlu0 %v962
    %v964 = vpop.xlane.xlu0 %963
    %v965 = vsel %vm898, %v787, -inf
    %966 = vmax.xlane.f32.xlu0 %v965
    %v967 = vpop.xlane.xlu0 %966
    %v968 = vsel %vm898, %v790, -inf
    %969 = vmax.xlane.f32.xlu0 %v968
    %v970 = vpop.xlane.xlu0 %969
    %v971 = vsel %vm898, %v834, -inf
    %972 = vmax.xlane.f32.xlu0 %v971
    %v973 = vpop.xlane.xlu0 %972
    %v974 = vsel %vm898, %v837, -inf
    %975 = vmax.xlane.f32.xlu0 %v974
    %v976 = vpop.xlane.xlu0 %975
    %v977 = vsel %vm898, %v840, -inf
    %978 = vmax.xlane.f32.xlu0 %v977
    %v979 = vpop.xlane.xlu0 %978
    %v980 = vsel %vm898, %v843, -inf
    %981 = vmax.xlane.f32.xlu0 %v980
    %v982 = vpop.xlane.xlu0 %981
    %v983 = vsel %vm898, %v887, -inf
    %984 = vmax.xlane.f32.xlu0 %v983
    %v985 = vpop.xlane.xlu0 %984
    %v986 = vsel %vm898, %v890, -inf
    %987 = vmax.xlane.f32.xlu0 %v986
    %v988 = vpop.xlane.xlu0 %987
    %v989 = vsel %vm898, %v893, -inf
    %990 = vmax.xlane.f32.xlu0 %v989
    %v991 = vpop.xlane.xlu0 %990
    %v992 = vsel %vm898, %v896, -inf
    %993 = vmax.xlane.f32.xlu0 %v992
    %v994 = vpop.xlane.xlu0 %993
    %v995 = vsub.f32 %v516, %v901
    %v996 = vsub.f32 %v519, %v904
    %v997 = vsub.f32 %v522, %v907
    %v998 = vsub.f32 %v525, %v910
    %v999 = vsub.f32 %v569, %v913
    %v1000 = vsub.f32 %v572, %v916
    %v1001 = vsub.f32 %v575, %v919
    %v1002 = vsub.f32 %v578, %v922
    %v1003 = vsub.f32 %v622, %v925
    %v1004 = vsub.f32 %v625, %v928
    %v1005 = vsub.f32 %v628, %v931
    %v1006 = vsub.f32 %v631, %v934
    %v1007 = vsub.f32 %v675, %v937
    %v1008 = vsub.f32 %v678, %v940
    %v1009 = vsub.f32 %v681, %v943
    %v1010 = vsub.f32 %v684, %v946
    %v1011 = vsub.f32 %v728, %v949
    %v1012 = vsub.f32 %v731, %v952
    %v1013 = vsub.f32 %v734, %v955
    %v1014 = vsub.f32 %v737, %v958
    %v1015 = vsub.f32 %v781, %v961
    %v1016 = vsub.f32 %v784, %v964
    %v1017 = vsub.f32 %v787, %v967
    %v1018 = vsub.f32 %v790, %v970
    %v1019 = vsub.f32 %v834, %v973
    %v1020 = vsub.f32 %v837, %v976
    %v1021 = vsub.f32 %v840, %v979
    %v1022 = vsub.f32 %v843, %v982
    %v1023 = vsub.f32 %v887, %v985
    %v1024 = vsub.f32 %v890, %v988
    %v1025 = vsub.f32 %v893, %v991
    %v1026 = vsub.f32 %v896, %v994
    %v1027 = vmul.f32 %v995, 1.442695
    %v1028 = vpow.pop %v1027
    %v1029 = vmul.f32 %v996, 1.442695
    %v1030 = vpow.pop %v1029
    %v1031 = vmul.f32 %v997, 1.442695
    %v1032 = vpow.pop %v1031
    %v1033 = vmul.f32 %v998, 1.442695
    %v1034 = vpow.pop %v1033
    %v1035 = vmul.f32 %v999, 1.442695
    %v1036 = vpow.pop %v1035
    %v1037 = vmul.f32 %v1000, 1.442695
    %v1038 = vpow.pop %v1037
    %v1039 = vmul.f32 %v1001, 1.442695
    %v1040 = vpow.pop %v1039
    %v1041 = vmul.f32 %v1002, 1.442695
    %v1042 = vpow.pop %v1041
    %v1043 = vmul.f32 %v1003, 1.442695
    %v1044 = vpow.pop %v1043
    %v1045 = vmul.f32 %v1004, 1.442695
    %v1046 = vpow.pop %v1045
    %v1047 = vmul.f32 %v1005, 1.442695
    %v1048 = vpow.pop %v1047
    %v1049 = vmul.f32 %v1006, 1.442695
    %v1050 = vpow.pop %v1049
    %v1051 = vmul.f32 %v1007, 1.442695
    %v1052 = vpow.pop %v1051
    %v1053 = vmul.f32 %v1008, 1.442695
    %v1054 = vpow.pop %v1053
    %v1055 = vmul.f32 %v1009, 1.442695
    %v1056 = vpow.pop %v1055
    %v1057 = vmul.f32 %v1010, 1.442695
    %v1058 = vpow.pop %v1057
    %v1059 = vmul.f32 %v1011, 1.442695
    %v1060 = vpow.pop %v1059
    %v1061 = vmul.f32 %v1012, 1.442695
    %v1062 = vpow.pop %v1061
    %v1063 = vmul.f32 %v1013, 1.442695
    %v1064 = vpow.pop %v1063
    %v1065 = vmul.f32 %v1014, 1.442695
    %v1066 = vpow.pop %v1065
    %v1067 = vmul.f32 %v1015, 1.442695
    %v1068 = vpow.pop %v1067
    %v1069 = vmul.f32 %v1016, 1.442695
    %v1070 = vpow.pop %v1069
    %v1071 = vmul.f32 %v1017, 1.442695
    %v1072 = vpow.pop %v1071
    %v1073 = vmul.f32 %v1018, 1.442695
    %v1074 = vpow.pop %v1073
    %v1075 = vmul.f32 %v1019, 1.442695
    %v1076 = vpow.pop %v1075
    %v1077 = vmul.f32 %v1020, 1.442695
    %v1078 = vpow.pop %v1077
    %v1079 = vmul.f32 %v1021, 1.442695
    %v1080 = vpow.pop %v1079
    %v1081 = vmul.f32 %v1022, 1.442695
    %v1082 = vpow.pop %v1081
    %v1083 = vmul.f32 %v1023, 1.442695
    %v1084 = vpow.pop %v1083
    %v1085 = vmul.f32 %v1024, 1.442695
    %v1086 = vpow.pop %v1085
    %v1087 = vmul.f32 %v1025, 1.442695
    %v1088 = vpow.pop %v1087
    %v1089 = vmul.f32 %v1026, 1.442695
    %v1090 = vpow.pop %v1089
    %v1091 = vsel %vm898, %v1028, 0.0
    %1092 = vadd.xlane.f32.xlu0 %v1091
    %v1093 = vpop.xlane.xlu0 %1092
    %v1094 = vsel %vm898, %v1030, 0.0
    %1095 = vadd.xlane.f32.xlu0 %v1094
    %v1096 = vpop.xlane.xlu0 %1095
    %v1097 = vsel %vm898, %v1032, 0.0
    %1098 = vadd.xlane.f32.xlu0 %v1097
    %v1099 = vpop.xlane.xlu0 %1098
    %v1100 = vsel %vm898, %v1034, 0.0
    %1101 = vadd.xlane.f32.xlu0 %v1100
    %v1102 = vpop.xlane.xlu0 %1101
    %v1103 = vsel %vm898, %v1036, 0.0
    %1104 = vadd.xlane.f32.xlu0 %v1103
    %v1105 = vpop.xlane.xlu0 %1104
    %v1106 = vsel %vm898, %v1038, 0.0
    %1107 = vadd.xlane.f32.xlu0 %v1106
    %v1108 = vpop.xlane.xlu0 %1107
    %v1109 = vsel %vm898, %v1040, 0.0
    %1110 = vadd.xlane.f32.xlu0 %v1109
    %v1111 = vpop.xlane.xlu0 %1110
    %v1112 = vsel %vm898, %v1042, 0.0
    %1113 = vadd.xlane.f32.xlu0 %v1112
    %v1114 = vpop.xlane.xlu0 %1113
    %v1115 = vsel %vm898, %v1044, 0.0
    %1116 = vadd.xlane.f32.xlu0 %v1115
    %v1117 = vpop.xlane.xlu0 %1116
    %v1118 = vsel %vm898, %v1046, 0.0
    %1119 = vadd.xlane.f32.xlu0 %v1118
    %v1120 = vpop.xlane.xlu0 %1119
    %v1121 = vsel %vm898, %v1048, 0.0
    %1122 = vadd.xlane.f32.xlu0 %v1121
    %v1123 = vpop.xlane.xlu0 %1122
    %v1124 = vsel %vm898, %v1050, 0.0
    %1125 = vadd.xlane.f32.xlu0 %v1124
    %v1126 = vpop.xlane.xlu0 %1125
    %v1127 = vsel %vm898, %v1052, 0.0
    %1128 = vadd.xlane.f32.xlu0 %v1127
    %v1129 = vpop.xlane.xlu0 %1128
    %v1130 = vsel %vm898, %v1054, 0.0
    %1131 = vadd.xlane.f32.xlu0 %v1130
    %v1132 = vpop.xlane.xlu0 %1131
    %v1133 = vsel %vm898, %v1056, 0.0
    %1134 = vadd.xlane.f32.xlu0 %v1133
    %v1135 = vpop.xlane.xlu0 %1134
    %v1136 = vsel %vm898, %v1058, 0.0
    %1137 = vadd.xlane.f32.xlu0 %v1136
    %v1138 = vpop.xlane.xlu0 %1137
    %v1139 = vsel %vm898, %v1060, 0.0
    %1140 = vadd.xlane.f32.xlu0 %v1139
    %v1141 = vpop.xlane.xlu0 %1140
    %v1142 = vsel %vm898, %v1062, 0.0
    %1143 = vadd.xlane.f32.xlu0 %v1142
    %v1144 = vpop.xlane.xlu0 %1143
    %v1145 = vsel %vm898, %v1064, 0.0
    %1146 = vadd.xlane.f32.xlu0 %v1145
    %v1147 = vpop.xlane.xlu0 %1146
    %v1148 = vsel %vm898, %v1066, 0.0
    %1149 = vadd.xlane.f32.xlu0 %v1148
    %v1150 = vpop.xlane.xlu0 %1149
    %v1151 = vsel %vm898, %v1068, 0.0
    %1152 = vadd.xlane.f32.xlu0 %v1151
    %v1153 = vpop.xlane.xlu0 %1152
    %v1154 = vsel %vm898, %v1070, 0.0
    %1155 = vadd.xlane.f32.xlu0 %v1154
    %v1156 = vpop.xlane.xlu0 %1155
    %v1157 = vsel %vm898, %v1072, 0.0
    %1158 = vadd.xlane.f32.xlu0 %v1157
    %v1159 = vpop.xlane.xlu0 %1158
    %v1160 = vsel %vm898, %v1074, 0.0
    %1161 = vadd.xlane.f32.xlu0 %v1160
    %v1162 = vpop.xlane.xlu0 %1161
    %v1163 = vsel %vm898, %v1076, 0.0
    %1164 = vadd.xlane.f32.xlu0 %v1163
    %v1165 = vpop.xlane.xlu0 %1164
    %v1166 = vsel %vm898, %v1078, 0.0
    %1167 = vadd.xlane.f32.xlu0 %v1166
    %v1168 = vpop.xlane.xlu0 %1167
    %v1169 = vsel %vm898, %v1080, 0.0
    %1170 = vadd.xlane.f32.xlu0 %v1169
    %v1171 = vpop.xlane.xlu0 %1170
    %v1172 = vsel %vm898, %v1082, 0.0
    %1173 = vadd.xlane.f32.xlu0 %v1172
    %v1174 = vpop.xlane.xlu0 %1173
    %v1175 = vsel %vm898, %v1084, 0.0
    %1176 = vadd.xlane.f32.xlu0 %v1175
    %v1177 = vpop.xlane.xlu0 %1176
    %v1178 = vsel %vm898, %v1086, 0.0
    %1179 = vadd.xlane.f32.xlu0 %v1178
    %v1180 = vpop.xlane.xlu0 %1179
    %v1181 = vsel %vm898, %v1088, 0.0
    %1182 = vadd.xlane.f32.xlu0 %v1181
    %v1183 = vpop.xlane.xlu0 %1182
    %v1184 = vsel %vm898, %v1090, 0.0
    %1185 = vadd.xlane.f32.xlu0 %v1184
    %v1186 = vpop.xlane.xlu0 %1185
    %v1187 = vrcp.pop %v1093
    %v1188 = vrcp.pop %v1096
    %v1189 = vrcp.pop %v1099
    %v1190 = vrcp.pop %v1102
    %v1191 = vrcp.pop %v1105
    %v1192 = vrcp.pop %v1108
    %v1193 = vrcp.pop %v1111
    %v1194 = vrcp.pop %v1114
    %v1195 = vrcp.pop %v1117
    %v1196 = vrcp.pop %v1120
    %v1197 = vrcp.pop %v1123
    %v1198 = vrcp.pop %v1126
    %v1199 = vrcp.pop %v1129
    %v1200 = vrcp.pop %v1132
    %v1201 = vrcp.pop %v1135
    %v1202 = vrcp.pop %v1138
    %v1203 = vrcp.pop %v1141
    %v1204 = vrcp.pop %v1144
    %v1205 = vrcp.pop %v1147
    %v1206 = vrcp.pop %v1150
    %v1207 = vrcp.pop %v1153
    %v1208 = vrcp.pop %v1156
    %v1209 = vrcp.pop %v1159
    %v1210 = vrcp.pop %v1162
    %v1211 = vrcp.pop %v1165
    %v1212 = vrcp.pop %v1168
    %v1213 = vrcp.pop %v1171
    %v1214 = vrcp.pop %v1174
    %v1215 = vrcp.pop %v1177
    %v1216 = vrcp.pop %v1180
    %v1217 = vrcp.pop %v1183
    %v1218 = vrcp.pop %v1186
    %v1219 = vmul.f32 %v1028, %v1187
    %v1220 = vmul.f32 %v1030, %v1188
    %v1221 = vmul.f32 %v1032, %v1189
    %v1222 = vmul.f32 %v1034, %v1190
    %v1223 = vmul.f32 %v1036, %v1191
    %v1224 = vmul.f32 %v1038, %v1192
    %v1225 = vmul.f32 %v1040, %v1193
    %v1226 = vmul.f32 %v1042, %v1194
    %v1227 = vmul.f32 %v1044, %v1195
    %v1228 = vmul.f32 %v1046, %v1196
    %v1229 = vmul.f32 %v1048, %v1197
    %v1230 = vmul.f32 %v1050, %v1198
    %v1231 = vmul.f32 %v1052, %v1199
    %v1232 = vmul.f32 %v1054, %v1200
    %v1233 = vmul.f32 %v1056, %v1201
    %v1234 = vmul.f32 %v1058, %v1202
    %v1235 = vmul.f32 %v1060, %v1203
    %v1236 = vmul.f32 %v1062, %v1204
    %v1237 = vmul.f32 %v1064, %v1205
    %v1238 = vmul.f32 %v1066, %v1206
    %v1239 = vmul.f32 %v1068, %v1207
    %v1240 = vmul.f32 %v1070, %v1208
    %v1241 = vmul.f32 %v1072, %v1209
    %v1242 = vmul.f32 %v1074, %v1210
    %v1243 = vmul.f32 %v1076, %v1211
    %v1244 = vmul.f32 %v1078, %v1212
    %v1245 = vmul.f32 %v1080, %v1213
    %v1246 = vmul.f32 %v1082, %v1214
    %v1247 = vmul.f32 %v1084, %v1215
    %v1248 = vmul.f32 %v1086, %v1216
    %v1249 = vmul.f32 %v1088, %v1217
    %v1250 = vmul.f32 %v1090, %v1218
    %v1251 = vpack.c.bf16 %v1219, %v1219
    %v1252 = vpack.c.bf16 %v1220, %v1220
    %v1253 = vpack.c.bf16 %v1221, %v1221
    %v1254 = vpack.c.bf16 %v1222, %v1222
    %v1255 = vpack.c.bf16 %v1223, %v1223
    %v1256 = vpack.c.bf16 %v1224, %v1224
    %v1257 = vpack.c.bf16 %v1225, %v1225
    %v1258 = vpack.c.bf16 %v1226, %v1226
    %v1259 = vpack.c.bf16 %v1227, %v1227
    %v1260 = vpack.c.bf16 %v1228, %v1228
    %v1261 = vpack.c.bf16 %v1229, %v1229
    %v1262 = vpack.c.bf16 %v1230, %v1230
    %v1263 = vpack.c.bf16 %v1231, %v1231
    %v1264 = vpack.c.bf16 %v1232, %v1232
    %v1265 = vpack.c.bf16 %v1233, %v1233
    %v1266 = vpack.c.bf16 %v1234, %v1234
    %v1267 = vpack.c.bf16 %v1235, %v1235
    %v1268 = vpack.c.bf16 %v1236, %v1236
    %v1269 = vpack.c.bf16 %v1237, %v1237
    %v1270 = vpack.c.bf16 %v1238, %v1238
    %v1271 = vpack.c.bf16 %v1239, %v1239
    %v1272 = vpack.c.bf16 %v1240, %v1240
    %v1273 = vpack.c.bf16 %v1241, %v1241
    %v1274 = vpack.c.bf16 %v1242, %v1242
    %v1275 = vpack.c.bf16 %v1243, %v1243
    %v1276 = vpack.c.bf16 %v1244, %v1244
    %v1277 = vpack.c.bf16 %v1245, %v1245
    %v1278 = vpack.c.bf16 %v1246, %v1246
    %v1279 = vpack.c.bf16 %v1247, %v1247
    %v1280 = vpack.c.bf16 %v1248, %v1248
    %v1281 = vpack.c.bf16 %v1249, %v1249
    %v1282 = vpack.c.bf16 %v1250, %v1250
    %v1283 = vpack.c.bf16 %v394, %v394
    %v1284 = vpack.c.bf16 %v396, %v396
    %v1285 = vpack.c.bf16 %v399, %v399
    %v1286 = vpack.c.bf16 %v401, %v401
    %v1287 = vpack.c.bf16 %v404, %v404
    %v1288 = vpack.c.bf16 %v406, %v406
    %v1289 = vpack.c.bf16 %v409, %v409
    %v1290 = vpack.c.bf16 %v411, %v411
    %v1291 = vpack.c.bf16 %v414, %v414
    %v1292 = vpack.c.bf16 %v416, %v416
    %v1293 = vpack.c.bf16 %v419, %v419
    %v1294 = vpack.c.bf16 %v421, %v421
    %v1295 = vpack.c.bf16 %v424, %v424
    %v1296 = vpack.c.bf16 %v426, %v426
    %v1297 = vpack.c.bf16 %v429, %v429
    %v1298 = vpack.c.bf16 %v431, %v431
    %v1299 = vpack.c.bf16 %v434, %v434
    %v1300 = vpack.c.bf16 %v436, %v436
    %v1301 = vpack.c.bf16 %v439, %v439
    %v1302 = vpack.c.bf16 %v441, %v441
    %v1303 = vpack.c.bf16 %v444, %v444
    %v1304 = vpack.c.bf16 %v446, %v446
    %v1305 = vpack.c.bf16 %v449, %v449
    %v1306 = vpack.c.bf16 %v451, %v451
    %v1307 = vpack.c.bf16 %v454, %v454
    %v1308 = vpack.c.bf16 %v456, %v456
    %v1309 = vpack.c.bf16 %v459, %v459
    %v1310 = vpack.c.bf16 %v461, %v461
    %v1311 = vpack.c.bf16 %v464, %v464
    %v1312 = vpack.c.bf16 %v466, %v466
    %v1313 = vpack.c.bf16 %v469, %v469
    %v1314 = vpack.c.bf16 %v471, %v471
    %v1319 = vunpack.c.l.b16 %v1251
    %v1320 = vunpack.c.l.b16 %v1252
    %v1321 = vunpack.c.l.b16 %v1253
    %v1322 = vunpack.c.l.b16 %v1254
    %v1323 = vpack.c.b16 %v1320, %v1319
    %v1324 = vpack.c.b16 %v1322, %v1321
    %v1329 = vunpack.c.l.b16 %v1283
    %v1330 = vunpack.c.l.b16 %v1284
    %v1331 = vunpack.c.l.b16 %v1285
    %v1332 = vunpack.c.l.b16 %v1286
    %v1333 = vpack.c.b16 %v1330, %v1329
    %v1334 = vpack.c.b16 %v1332, %v1331
    %1335 = vrot.lane.b32.xlu0 %v1333, 112
    %v1336 = vpop.permute.xlu0 %1335
    %1337 = vrot.lane.b32.xlu0 %v1334, 112
    %v1338 = vpop.permute.xlu0 %1337
    %v1342 = vsel %vm898, %v1323, 0
    %v1345 = vsel %vm898, %v1324, 0
    %1347 = vmatpush.bf16.msra.mxu0 0
    %1348 = vmatpush.bf16.msra.mxu0 0
    %1349 = vmatpush.bf16.msra.mxu0 0
    %1350 = vmatpush.bf16.msra.mxu0 0
    %1351 = vmatpush.bf16.msra.mxu0 0
    %1352 = vmatpush.bf16.msra.mxu0 0
    %1353 = vmatpush.bf16.msra.mxu0 %v1338
    %1354 = vmatpush.bf16.msra.mxu0 %v1336
    %1355 = vmatmul.bf16.gmra.mxu0 %v1342
    %v1356 = vpop.f32.mrf.mxu0
    %v1357 = vadd.f32 0.0, %v1356
    %v1358 = vpop.f32.mrf.mxu0
    %v1359 = vadd.f32 0.0, %v1358
    %1360 = vmatmul.bf16.gmra.mxu0 %v1345
    %v1361 = vpop.f32.mrf.mxu0
    %v1362 = vadd.f32 0.0, %v1361
    %v1363 = vpop.f32.mrf.mxu0
    %v1364 = vadd.f32 0.0, %v1363
    %1365 = vdwg.mxu0
    %v1370 = vunpack.c.l.b16 %v1255
    %v1371 = vunpack.c.l.b16 %v1256
    %v1372 = vunpack.c.l.b16 %v1257
    %v1373 = vunpack.c.l.b16 %v1258
    %v1374 = vpack.c.b16 %v1371, %v1370
    %v1375 = vpack.c.b16 %v1373, %v1372
    %v1380 = vunpack.c.l.b16 %v1287
    %v1381 = vunpack.c.l.b16 %v1288
    %v1382 = vunpack.c.l.b16 %v1289
    %v1383 = vunpack.c.l.b16 %v1290
    %v1384 = vpack.c.b16 %v1381, %v1380
    %v1385 = vpack.c.b16 %v1383, %v1382
    %1386 = vrot.lane.b32.xlu0 %v1384, 112
    %v1387 = vpop.permute.xlu0 %1386
    %1388 = vrot.lane.b32.xlu0 %v1385, 112
    %v1389 = vpop.permute.xlu0 %1388
    %v1393 = vsel %vm898, %v1374, 0
    %v1396 = vsel %vm898, %v1375, 0
    %1398 = vmatpush.bf16.msra.mxu0 0
    %1399 = vmatpush.bf16.msra.mxu0 0
    %1400 = vmatpush.bf16.msra.mxu0 0
    %1401 = vmatpush.bf16.msra.mxu0 0
    %1402 = vmatpush.bf16.msra.mxu0 0
    %1403 = vmatpush.bf16.msra.mxu0 0
    %1404 = vmatpush.bf16.msra.mxu0 %v1389
    %1405 = vmatpush.bf16.msra.mxu0 %v1387
    %1406 = vmatmul.bf16.gmra.mxu0 %v1393
    %v1407 = vpop.f32.mrf.mxu0
    %v1408 = vadd.f32 0.0, %v1407
    %v1409 = vpop.f32.mrf.mxu0
    %v1410 = vadd.f32 0.0, %v1409
    %1411 = vmatmul.bf16.gmra.mxu0 %v1396
    %v1412 = vpop.f32.mrf.mxu0
    %v1413 = vadd.f32 0.0, %v1412
    %v1414 = vpop.f32.mrf.mxu0
    %v1415 = vadd.f32 0.0, %v1414
    %1416 = vdwg.mxu0
    %v1421 = vunpack.c.l.b16 %v1259
    %v1422 = vunpack.c.l.b16 %v1260
    %v1423 = vunpack.c.l.b16 %v1261
    %v1424 = vunpack.c.l.b16 %v1262
    %v1425 = vpack.c.b16 %v1422, %v1421
    %v1426 = vpack.c.b16 %v1424, %v1423
    %v1431 = vunpack.c.l.b16 %v1291
    %v1432 = vunpack.c.l.b16 %v1292
    %v1433 = vunpack.c.l.b16 %v1293
    %v1434 = vunpack.c.l.b16 %v1294
    %v1435 = vpack.c.b16 %v1432, %v1431
    %v1436 = vpack.c.b16 %v1434, %v1433
    %1437 = vrot.lane.b32.xlu0 %v1435, 112
    %v1438 = vpop.permute.xlu0 %1437
    %1439 = vrot.lane.b32.xlu0 %v1436, 112
    %v1440 = vpop.permute.xlu0 %1439
    %v1444 = vsel %vm898, %v1425, 0
    %v1447 = vsel %vm898, %v1426, 0
    %1449 = vmatpush.bf16.msra.mxu0 0
    %1450 = vmatpush.bf16.msra.mxu0 0
    %1451 = vmatpush.bf16.msra.mxu0 0
    %1452 = vmatpush.bf16.msra.mxu0 0
    %1453 = vmatpush.bf16.msra.mxu0 0
    %1454 = vmatpush.bf16.msra.mxu0 0
    %1455 = vmatpush.bf16.msra.mxu0 %v1440
    %1456 = vmatpush.bf16.msra.mxu0 %v1438
    %1457 = vmatmul.bf16.gmra.mxu0 %v1444
    %v1458 = vpop.f32.mrf.mxu0
    %v1459 = vadd.f32 0.0, %v1458
    %v1460 = vpop.f32.mrf.mxu0
    %v1461 = vadd.f32 0.0, %v1460
    %1462 = vmatmul.bf16.gmra.mxu0 %v1447
    %v1463 = vpop.f32.mrf.mxu0
    %v1464 = vadd.f32 0.0, %v1463
    %v1465 = vpop.f32.mrf.mxu0
    %v1466 = vadd.f32 0.0, %v1465
    %1467 = vdwg.mxu0
    %v1472 = vunpack.c.l.b16 %v1263
    %v1473 = vunpack.c.l.b16 %v1264
    %v1474 = vunpack.c.l.b16 %v1265
    %v1475 = vunpack.c.l.b16 %v1266
    %v1476 = vpack.c.b16 %v1473, %v1472
    %v1477 = vpack.c.b16 %v1475, %v1474
    %v1482 = vunpack.c.l.b16 %v1295
    %v1483 = vunpack.c.l.b16 %v1296
    %v1484 = vunpack.c.l.b16 %v1297
    %v1485 = vunpack.c.l.b16 %v1298
    %v1486 = vpack.c.b16 %v1483, %v1482
    %v1487 = vpack.c.b16 %v1485, %v1484
    %1488 = vrot.lane.b32.xlu0 %v1486, 112
    %v1489 = vpop.permute.xlu0 %1488
    %1490 = vrot.lane.b32.xlu0 %v1487, 112
    %v1491 = vpop.permute.xlu0 %1490
    %v1495 = vsel %vm898, %v1476, 0
    %v1498 = vsel %vm898, %v1477, 0
    %1500 = vmatpush.bf16.msra.mxu0 0
    %1501 = vmatpush.bf16.msra.mxu0 0
    %1502 = vmatpush.bf16.msra.mxu0 0
    %1503 = vmatpush.bf16.msra.mxu0 0
    %1504 = vmatpush.bf16.msra.mxu0 0
    %1505 = vmatpush.bf16.msra.mxu0 0
    %1506 = vmatpush.bf16.msra.mxu0 %v1491
    %1507 = vmatpush.bf16.msra.mxu0 %v1489
    %1508 = vmatmul.bf16.gmra.mxu0 %v1495
    %v1509 = vpop.f32.mrf.mxu0
    %v1510 = vadd.f32 0.0, %v1509
    %v1511 = vpop.f32.mrf.mxu0
    %v1512 = vadd.f32 0.0, %v1511
    %1513 = vmatmul.bf16.gmra.mxu0 %v1498
    %v1514 = vpop.f32.mrf.mxu0
    %v1515 = vadd.f32 0.0, %v1514
    %v1516 = vpop.f32.mrf.mxu0
    %v1517 = vadd.f32 0.0, %v1516
    %1518 = vdwg.mxu0
    %v1523 = vunpack.c.l.b16 %v1267
    %v1524 = vunpack.c.l.b16 %v1268
    %v1525 = vunpack.c.l.b16 %v1269
    %v1526 = vunpack.c.l.b16 %v1270
    %v1527 = vpack.c.b16 %v1524, %v1523
    %v1528 = vpack.c.b16 %v1526, %v1525
    %v1533 = vunpack.c.l.b16 %v1299
    %v1534 = vunpack.c.l.b16 %v1300
    %v1535 = vunpack.c.l.b16 %v1301
    %v1536 = vunpack.c.l.b16 %v1302
    %v1537 = vpack.c.b16 %v1534, %v1533
    %v1538 = vpack.c.b16 %v1536, %v1535
    %1539 = vrot.lane.b32.xlu0 %v1537, 112
    %v1540 = vpop.permute.xlu0 %1539
    %1541 = vrot.lane.b32.xlu0 %v1538, 112
    %v1542 = vpop.permute.xlu0 %1541
    %v1546 = vsel %vm898, %v1527, 0
    %v1549 = vsel %vm898, %v1528, 0
    %1551 = vmatpush.bf16.msra.mxu0 0
    %1552 = vmatpush.bf16.msra.mxu0 0
    %1553 = vmatpush.bf16.msra.mxu0 0
    %1554 = vmatpush.bf16.msra.mxu0 0
    %1555 = vmatpush.bf16.msra.mxu0 0
    %1556 = vmatpush.bf16.msra.mxu0 0
    %1557 = vmatpush.bf16.msra.mxu0 %v1542
    %1558 = vmatpush.bf16.msra.mxu0 %v1540
    %1559 = vmatmul.bf16.gmra.mxu0 %v1546
    %v1560 = vpop.f32.mrf.mxu0
    %v1561 = vadd.f32 0.0, %v1560
    %v1562 = vpop.f32.mrf.mxu0
    %v1563 = vadd.f32 0.0, %v1562
    %1564 = vmatmul.bf16.gmra.mxu0 %v1549
    %v1565 = vpop.f32.mrf.mxu0
    %v1566 = vadd.f32 0.0, %v1565
    %v1567 = vpop.f32.mrf.mxu0
    %v1568 = vadd.f32 0.0, %v1567
    %1569 = vdwg.mxu0
    %v1574 = vunpack.c.l.b16 %v1271
    %v1575 = vunpack.c.l.b16 %v1272
    %v1576 = vunpack.c.l.b16 %v1273
    %v1577 = vunpack.c.l.b16 %v1274
    %v1578 = vpack.c.b16 %v1575, %v1574
    %v1579 = vpack.c.b16 %v1577, %v1576
    %v1584 = vunpack.c.l.b16 %v1303
    %v1585 = vunpack.c.l.b16 %v1304
    %v1586 = vunpack.c.l.b16 %v1305
    %v1587 = vunpack.c.l.b16 %v1306
    %v1588 = vpack.c.b16 %v1585, %v1584
    %v1589 = vpack.c.b16 %v1587, %v1586
    %1590 = vrot.lane.b32.xlu0 %v1588, 112
    %v1591 = vpop.permute.xlu0 %1590
    %1592 = vrot.lane.b32.xlu0 %v1589, 112
    %v1593 = vpop.permute.xlu0 %1592
    %v1597 = vsel %vm898, %v1578, 0
    %v1600 = vsel %vm898, %v1579, 0
    %1602 = vmatpush.bf16.msra.mxu0 0
    %1603 = vmatpush.bf16.msra.mxu0 0
    %1604 = vmatpush.bf16.msra.mxu0 0
    %1605 = vmatpush.bf16.msra.mxu0 0
    %1606 = vmatpush.bf16.msra.mxu0 0
    %1607 = vmatpush.bf16.msra.mxu0 0
    %1608 = vmatpush.bf16.msra.mxu0 %v1593
    %1609 = vmatpush.bf16.msra.mxu0 %v1591
    %1610 = vmatmul.bf16.gmra.mxu0 %v1597
    %v1611 = vpop.f32.mrf.mxu0
    %v1612 = vadd.f32 0.0, %v1611
    %v1613 = vpop.f32.mrf.mxu0
    %v1614 = vadd.f32 0.0, %v1613
    %1615 = vmatmul.bf16.gmra.mxu0 %v1600
    %v1616 = vpop.f32.mrf.mxu0
    %v1617 = vadd.f32 0.0, %v1616
    %v1618 = vpop.f32.mrf.mxu0
    %v1619 = vadd.f32 0.0, %v1618
    %1620 = vdwg.mxu0
    %v1625 = vunpack.c.l.b16 %v1275
    %v1626 = vunpack.c.l.b16 %v1276
    %v1627 = vunpack.c.l.b16 %v1277
    %v1628 = vunpack.c.l.b16 %v1278
    %v1629 = vpack.c.b16 %v1626, %v1625
    %v1630 = vpack.c.b16 %v1628, %v1627
    %v1635 = vunpack.c.l.b16 %v1307
    %v1636 = vunpack.c.l.b16 %v1308
    %v1637 = vunpack.c.l.b16 %v1309
    %v1638 = vunpack.c.l.b16 %v1310
    %v1639 = vpack.c.b16 %v1636, %v1635
    %v1640 = vpack.c.b16 %v1638, %v1637
    %1641 = vrot.lane.b32.xlu0 %v1639, 112
    %v1642 = vpop.permute.xlu0 %1641
    %1643 = vrot.lane.b32.xlu0 %v1640, 112
    %v1644 = vpop.permute.xlu0 %1643
    %v1648 = vsel %vm898, %v1629, 0
    %v1651 = vsel %vm898, %v1630, 0
    %1653 = vmatpush.bf16.msra.mxu0 0
    %1654 = vmatpush.bf16.msra.mxu0 0
    %1655 = vmatpush.bf16.msra.mxu0 0
    %1656 = vmatpush.bf16.msra.mxu0 0
    %1657 = vmatpush.bf16.msra.mxu0 0
    %1658 = vmatpush.bf16.msra.mxu0 0
    %1659 = vmatpush.bf16.msra.mxu0 %v1644
    %1660 = vmatpush.bf16.msra.mxu0 %v1642
    %1661 = vmatmul.bf16.gmra.mxu0 %v1648
    %v1662 = vpop.f32.mrf.mxu0
    %v1663 = vadd.f32 0.0, %v1662
    %v1664 = vpop.f32.mrf.mxu0
    %v1665 = vadd.f32 0.0, %v1664
    %1666 = vmatmul.bf16.gmra.mxu0 %v1651
    %v1667 = vpop.f32.mrf.mxu0
    %v1668 = vadd.f32 0.0, %v1667
    %v1669 = vpop.f32.mrf.mxu0
    %v1670 = vadd.f32 0.0, %v1669
    %1671 = vdwg.mxu0
    %v1676 = vunpack.c.l.b16 %v1279
    %v1677 = vunpack.c.l.b16 %v1280
    %v1678 = vunpack.c.l.b16 %v1281
    %v1679 = vunpack.c.l.b16 %v1282
    %v1680 = vpack.c.b16 %v1677, %v1676
    %v1681 = vpack.c.b16 %v1679, %v1678
    %v1686 = vunpack.c.l.b16 %v1311
    %v1687 = vunpack.c.l.b16 %v1312
    %v1688 = vunpack.c.l.b16 %v1313
    %v1689 = vunpack.c.l.b16 %v1314
    %v1690 = vpack.c.b16 %v1687, %v1686
    %v1691 = vpack.c.b16 %v1689, %v1688
    %1692 = vrot.lane.b32.xlu0 %v1690, 112
    %v1693 = vpop.permute.xlu0 %1692
    %1694 = vrot.lane.b32.xlu0 %v1691, 112
    %v1695 = vpop.permute.xlu0 %1694
    %v1699 = vsel %vm898, %v1680, 0
    %v1702 = vsel %vm898, %v1681, 0
    %1704 = vmatpush.bf16.msra.mxu0 0
    %1705 = vmatpush.bf16.msra.mxu0 0
    %1706 = vmatpush.bf16.msra.mxu0 0
    %1707 = vmatpush.bf16.msra.mxu0 0
    %1708 = vmatpush.bf16.msra.mxu0 0
    %1709 = vmatpush.bf16.msra.mxu0 0
    %1710 = vmatpush.bf16.msra.mxu0 %v1695
    %1711 = vmatpush.bf16.msra.mxu0 %v1693
    %1712 = vmatmul.bf16.gmra.mxu0 %v1699
    %v1713 = vpop.f32.mrf.mxu0
    %v1714 = vadd.f32 0.0, %v1713
    %v1715 = vpop.f32.mrf.mxu0
    %v1716 = vadd.f32 0.0, %v1715
    %1717 = vmatmul.bf16.gmra.mxu0 %v1702
    %v1718 = vpop.f32.mrf.mxu0
    %v1719 = vadd.f32 0.0, %v1718
    %v1720 = vpop.f32.mrf.mxu0
    %v1721 = vadd.f32 0.0, %v1720
    %1722 = vdwg.mxu0
    %1723 = vrot.lane.b32.xlu0 %v237, 120
    %v1724 = vpop.permute.xlu0 %1723
    %1725 = vrot.lane.b32.xlu0 %v239, 120
    %v1726 = vpop.permute.xlu0 %1725
    %1727 = vrot.lane.b32.xlu0 %v242, 120
    %v1728 = vpop.permute.xlu0 %1727
    %1729 = vrot.lane.b32.xlu0 %v244, 120
    %v1730 = vpop.permute.xlu0 %1729
    %1731 = vrot.lane.b32.xlu0 %v394, 120
    %v1732 = vpop.permute.xlu0 %1731
    %1733 = vrot.lane.b32.xlu0 %v396, 120
    %v1734 = vpop.permute.xlu0 %1733
    %1735 = vrot.lane.b32.xlu0 %v399, 120
    %v1736 = vpop.permute.xlu0 %1735
    %1737 = vrot.lane.b32.xlu0 %v401, 120
    %v1738 = vpop.permute.xlu0 %1737
    %v1739 = vsel %vm473, %v1724, 0
    %v1741 = vsel %vm473, %v1726, 0
    %v1743 = vsel %vm473, %v1728, 0
    %v1745 = vsel %vm473, %v1730, 0
    %v1747 = vsel %vm473, %v1732, 0
    %v1749 = vsel %vm473, %v1734, 0
    %v1751 = vsel %vm473, %v1736, 0
    %v1753 = vsel %vm473, %v1738, 0
    %1755 = vmatpush.xpose.msra.mxu0 0.0
    %1756 = vmatpush.xpose.msra.mxu0 0.0
    %1757 = vmatpush.xpose.msra.mxu0 0.0
    %1758 = vmatpush.xpose.msra.mxu0 0.0
    %1759 = vmatpush.xpose.msra.mxu0 0.0
    %1760 = vmatpush.xpose.msra.mxu0 0.0
    %1761 = vmatpush.xpose.msra.mxu0 0.0
    %1762 = vmatpush.xpose.msra.mxu0 0.0
    %1763 = vmatpush.xpose.msra.mxu0 0.0
    %1764 = vmatpush.xpose.msra.mxu0 0.0
    %1765 = vmatpush.xpose.msra.mxu0 0.0
    %1766 = vmatpush.xpose.msra.mxu0 0.0
    %1767 = vmatpush.xpose.msra.mxu0 %v1753
    %1768 = vmatpush.xpose.msra.mxu0 %v1751
    %1769 = vmatpush.xpose.msra.mxu0 %v1749
    %1770 = vmatpush.xpose.msra.mxu0 %v1747
    %1771 = vmatmul.f32.gmra.mxu0 %v1739
    %v1772 = vpop.f32.mrf.mxu0
    %v1773 = vadd.f32 0.0, %v1772
    %1774 = vmatmul.f32.gmra.mxu0 %v1741
    %v1775 = vpop.f32.mrf.mxu0
    %v1776 = vadd.f32 0.0, %v1775
    %1777 = vmatmul.f32.gmra.mxu0 %v1743
    %v1778 = vpop.f32.mrf.mxu0
    %v1779 = vadd.f32 0.0, %v1778
    %1780 = vmatmul.f32.gmra.mxu0 %v1745
    %v1781 = vpop.f32.mrf.mxu0
    %v1782 = vadd.f32 0.0, %v1781
    %1783 = vdwg.mxu0
    %1784 = vrot.lane.b32.xlu0 %v247, 120
    %v1785 = vpop.permute.xlu0 %1784
    %1786 = vrot.lane.b32.xlu0 %v249, 120
    %v1787 = vpop.permute.xlu0 %1786
    %1788 = vrot.lane.b32.xlu0 %v252, 120
    %v1789 = vpop.permute.xlu0 %1788
    %1790 = vrot.lane.b32.xlu0 %v254, 120
    %v1791 = vpop.permute.xlu0 %1790
    %1792 = vrot.lane.b32.xlu0 %v404, 120
    %v1793 = vpop.permute.xlu0 %1792
    %1794 = vrot.lane.b32.xlu0 %v406, 120
    %v1795 = vpop.permute.xlu0 %1794
    %1796 = vrot.lane.b32.xlu0 %v409, 120
    %v1797 = vpop.permute.xlu0 %1796
    %1798 = vrot.lane.b32.xlu0 %v411, 120
    %v1799 = vpop.permute.xlu0 %1798
    %v1800 = vsel %vm473, %v1785, 0
    %v1802 = vsel %vm473, %v1787, 0
    %v1804 = vsel %vm473, %v1789, 0
    %v1806 = vsel %vm473, %v1791, 0
    %v1808 = vsel %vm473, %v1793, 0
    %v1810 = vsel %vm473, %v1795, 0
    %v1812 = vsel %vm473, %v1797, 0
    %v1814 = vsel %vm473, %v1799, 0
    %1816 = vmatpush.xpose.msra.mxu0 0.0
    %1817 = vmatpush.xpose.msra.mxu0 0.0
    %1818 = vmatpush.xpose.msra.mxu0 0.0
    %1819 = vmatpush.xpose.msra.mxu0 0.0
    %1820 = vmatpush.xpose.msra.mxu0 0.0
    %1821 = vmatpush.xpose.msra.mxu0 0.0
    %1822 = vmatpush.xpose.msra.mxu0 0.0
    %1823 = vmatpush.xpose.msra.mxu0 0.0
    %1824 = vmatpush.xpose.msra.mxu0 0.0
    %1825 = vmatpush.xpose.msra.mxu0 0.0
    %1826 = vmatpush.xpose.msra.mxu0 0.0
    %1827 = vmatpush.xpose.msra.mxu0 0.0
    %1828 = vmatpush.xpose.msra.mxu0 %v1814
    %1829 = vmatpush.xpose.msra.mxu0 %v1812
    %1830 = vmatpush.xpose.msra.mxu0 %v1810
    %1831 = vmatpush.xpose.msra.mxu0 %v1808
    %1832 = vmatmul.f32.gmra.mxu0 %v1800
    %v1833 = vpop.f32.mrf.mxu0
    %v1834 = vadd.f32 0.0, %v1833
    %1835 = vmatmul.f32.gmra.mxu0 %v1802
    %v1836 = vpop.f32.mrf.mxu0
    %v1837 = vadd.f32 0.0, %v1836
    %1838 = vmatmul.f32.gmra.mxu0 %v1804
    %v1839 = vpop.f32.mrf.mxu0
    %v1840 = vadd.f32 0.0, %v1839
    %1841 = vmatmul.f32.gmra.mxu0 %v1806
    %v1842 = vpop.f32.mrf.mxu0
    %v1843 = vadd.f32 0.0, %v1842
    %1844 = vdwg.mxu0
    %1845 = vrot.lane.b32.xlu0 %v257, 120
    %v1846 = vpop.permute.xlu0 %1845
    %1847 = vrot.lane.b32.xlu0 %v259, 120
    %v1848 = vpop.permute.xlu0 %1847
    %1849 = vrot.lane.b32.xlu0 %v262, 120
    %v1850 = vpop.permute.xlu0 %1849
    %1851 = vrot.lane.b32.xlu0 %v264, 120
    %v1852 = vpop.permute.xlu0 %1851
    %1853 = vrot.lane.b32.xlu0 %v414, 120
    %v1854 = vpop.permute.xlu0 %1853
    %1855 = vrot.lane.b32.xlu0 %v416, 120
    %v1856 = vpop.permute.xlu0 %1855
    %1857 = vrot.lane.b32.xlu0 %v419, 120
    %v1858 = vpop.permute.xlu0 %1857
    %1859 = vrot.lane.b32.xlu0 %v421, 120
    %v1860 = vpop.permute.xlu0 %1859
    %v1861 = vsel %vm473, %v1846, 0
    %v1863 = vsel %vm473, %v1848, 0
    %v1865 = vsel %vm473, %v1850, 0
    %v1867 = vsel %vm473, %v1852, 0
    %v1869 = vsel %vm473, %v1854, 0
    %v1871 = vsel %vm473, %v1856, 0
    %v1873 = vsel %vm473, %v1858, 0
    %v1875 = vsel %vm473, %v1860, 0
    %1877 = vmatpush.xpose.msra.mxu0 0.0
    %1878 = vmatpush.xpose.msra.mxu0 0.0
    %1879 = vmatpush.xpose.msra.mxu0 0.0
    %1880 = vmatpush.xpose.msra.mxu0 0.0
    %1881 = vmatpush.xpose.msra.mxu0 0.0
    %1882 = vmatpush.xpose.msra.mxu0 0.0
    %1883 = vmatpush.xpose.msra.mxu0 0.0
    %1884 = vmatpush.xpose.msra.mxu0 0.0
    %1885 = vmatpush.xpose.msra.mxu0 0.0
    %1886 = vmatpush.xpose.msra.mxu0 0.0
    %1887 = vmatpush.xpose.msra.mxu0 0.0
    %1888 = vmatpush.xpose.msra.mxu0 0.0
    %1889 = vmatpush.xpose.msra.mxu0 %v1875
    %1890 = vmatpush.xpose.msra.mxu0 %v1873
    %1891 = vmatpush.xpose.msra.mxu0 %v1871
    %1892 = vmatpush.xpose.msra.mxu0 %v1869
    %1893 = vmatmul.f32.gmra.mxu0 %v1861
    %v1894 = vpop.f32.mrf.mxu0
    %v1895 = vadd.f32 0.0, %v1894
    %1896 = vmatmul.f32.gmra.mxu0 %v1863
    %v1897 = vpop.f32.mrf.mxu0
    %v1898 = vadd.f32 0.0, %v1897
    %1899 = vmatmul.f32.gmra.mxu0 %v1865
    %v1900 = vpop.f32.mrf.mxu0
    %v1901 = vadd.f32 0.0, %v1900
    %1902 = vmatmul.f32.gmra.mxu0 %v1867
    %v1903 = vpop.f32.mrf.mxu0
    %v1904 = vadd.f32 0.0, %v1903
    %1905 = vdwg.mxu0
    %1906 = vrot.lane.b32.xlu0 %v267, 120
    %v1907 = vpop.permute.xlu0 %1906
    %1908 = vrot.lane.b32.xlu0 %v269, 120
    %v1909 = vpop.permute.xlu0 %1908
    %1910 = vrot.lane.b32.xlu0 %v272, 120
    %v1911 = vpop.permute.xlu0 %1910
    %1912 = vrot.lane.b32.xlu0 %v274, 120
    %v1913 = vpop.permute.xlu0 %1912
    %1914 = vrot.lane.b32.xlu0 %v424, 120
    %v1915 = vpop.permute.xlu0 %1914
    %1916 = vrot.lane.b32.xlu0 %v426, 120
    %v1917 = vpop.permute.xlu0 %1916
    %1918 = vrot.lane.b32.xlu0 %v429, 120
    %v1919 = vpop.permute.xlu0 %1918
    %1920 = vrot.lane.b32.xlu0 %v431, 120
    %v1921 = vpop.permute.xlu0 %1920
    %v1922 = vsel %vm473, %v1907, 0
    %v1924 = vsel %vm473, %v1909, 0
    %v1926 = vsel %vm473, %v1911, 0
    %v1928 = vsel %vm473, %v1913, 0
    %v1930 = vsel %vm473, %v1915, 0
    %v1932 = vsel %vm473, %v1917, 0
    %v1934 = vsel %vm473, %v1919, 0
    %v1936 = vsel %vm473, %v1921, 0
    %1938 = vmatpush.xpose.msra.mxu0 0.0
    %1939 = vmatpush.xpose.msra.mxu0 0.0
    %1940 = vmatpush.xpose.msra.mxu0 0.0
    %1941 = vmatpush.xpose.msra.mxu0 0.0
    %1942 = vmatpush.xpose.msra.mxu0 0.0
    %1943 = vmatpush.xpose.msra.mxu0 0.0
    %1944 = vmatpush.xpose.msra.mxu0 0.0
    %1945 = vmatpush.xpose.msra.mxu0 0.0
    %1946 = vmatpush.xpose.msra.mxu0 0.0
    %1947 = vmatpush.xpose.msra.mxu0 0.0
    %1948 = vmatpush.xpose.msra.mxu0 0.0
    %1949 = vmatpush.xpose.msra.mxu0 0.0
    %1950 = vmatpush.xpose.msra.mxu0 %v1936
    %1951 = vmatpush.xpose.msra.mxu0 %v1934
    %1952 = vmatpush.xpose.msra.mxu0 %v1932
    %1953 = vmatpush.xpose.msra.mxu0 %v1930
    %1954 = vmatmul.f32.gmra.mxu0 %v1922
    %v1955 = vpop.f32.mrf.mxu0
    %v1956 = vadd.f32 0.0, %v1955
    %1957 = vmatmul.f32.gmra.mxu0 %v1924
    %v1958 = vpop.f32.mrf.mxu0
    %v1959 = vadd.f32 0.0, %v1958
    %1960 = vmatmul.f32.gmra.mxu0 %v1926
    %v1961 = vpop.f32.mrf.mxu0
    %v1962 = vadd.f32 0.0, %v1961
    %1963 = vmatmul.f32.gmra.mxu0 %v1928
    %v1964 = vpop.f32.mrf.mxu0
    %v1965 = vadd.f32 0.0, %v1964
    %1966 = vdwg.mxu0
    %1967 = vrot.lane.b32.xlu0 %v277, 120
    %v1968 = vpop.permute.xlu0 %1967
    %1969 = vrot.lane.b32.xlu0 %v279, 120
    %v1970 = vpop.permute.xlu0 %1969
    %1971 = vrot.lane.b32.xlu0 %v282, 120
    %v1972 = vpop.permute.xlu0 %1971
    %1973 = vrot.lane.b32.xlu0 %v284, 120
    %v1974 = vpop.permute.xlu0 %1973
    %1975 = vrot.lane.b32.xlu0 %v434, 120
    %v1976 = vpop.permute.xlu0 %1975
    %1977 = vrot.lane.b32.xlu0 %v436, 120
    %v1978 = vpop.permute.xlu0 %1977
    %1979 = vrot.lane.b32.xlu0 %v439, 120
    %v1980 = vpop.permute.xlu0 %1979
    %1981 = vrot.lane.b32.xlu0 %v441, 120
    %v1982 = vpop.permute.xlu0 %1981
    %v1983 = vsel %vm473, %v1968, 0
    %v1985 = vsel %vm473, %v1970, 0
    %v1987 = vsel %vm473, %v1972, 0
    %v1989 = vsel %vm473, %v1974, 0
    %v1991 = vsel %vm473, %v1976, 0
    %v1993 = vsel %vm473, %v1978, 0
    %v1995 = vsel %vm473, %v1980, 0
    %v1997 = vsel %vm473, %v1982, 0
    %1999 = vmatpush.xpose.msra.mxu0 0.0
    %2000 = vmatpush.xpose.msra.mxu0 0.0
    %2001 = vmatpush.xpose.msra.mxu0 0.0
    %2002 = vmatpush.xpose.msra.mxu0 0.0
    %2003 = vmatpush.xpose.msra.mxu0 0.0
    %2004 = vmatpush.xpose.msra.mxu0 0.0
    %2005 = vmatpush.xpose.msra.mxu0 0.0
    %2006 = vmatpush.xpose.msra.mxu0 0.0
    %2007 = vmatpush.xpose.msra.mxu0 0.0
    %2008 = vmatpush.xpose.msra.mxu0 0.0
    %2009 = vmatpush.xpose.msra.mxu0 0.0
    %2010 = vmatpush.xpose.msra.mxu0 0.0
    %2011 = vmatpush.xpose.msra.mxu0 %v1997
    %2012 = vmatpush.xpose.msra.mxu0 %v1995
    %2013 = vmatpush.xpose.msra.mxu0 %v1993
    %2014 = vmatpush.xpose.msra.mxu0 %v1991
    %2015 = vmatmul.f32.gmra.mxu0 %v1983
    %v2016 = vpop.f32.mrf.mxu0
    %v2017 = vadd.f32 0.0, %v2016
    %2018 = vmatmul.f32.gmra.mxu0 %v1985
    %v2019 = vpop.f32.mrf.mxu0
    %v2020 = vadd.f32 0.0, %v2019
    %2021 = vmatmul.f32.gmra.mxu0 %v1987
    %v2022 = vpop.f32.mrf.mxu0
    %v2023 = vadd.f32 0.0, %v2022
    %2024 = vmatmul.f32.gmra.mxu0 %v1989
    %v2025 = vpop.f32.mrf.mxu0
    %v2026 = vadd.f32 0.0, %v2025
    %2027 = vdwg.mxu0
    %2028 = vrot.lane.b32.xlu0 %v287, 120
    %v2029 = vpop.permute.xlu0 %2028
    %2030 = vrot.lane.b32.xlu0 %v289, 120
    %v2031 = vpop.permute.xlu0 %2030
    %2032 = vrot.lane.b32.xlu0 %v292, 120
    %v2033 = vpop.permute.xlu0 %2032
    %2034 = vrot.lane.b32.xlu0 %v294, 120
    %v2035 = vpop.permute.xlu0 %2034
    %2036 = vrot.lane.b32.xlu0 %v444, 120
    %v2037 = vpop.permute.xlu0 %2036
    %2038 = vrot.lane.b32.xlu0 %v446, 120
    %v2039 = vpop.permute.xlu0 %2038
    %2040 = vrot.lane.b32.xlu0 %v449, 120
    %v2041 = vpop.permute.xlu0 %2040
    %2042 = vrot.lane.b32.xlu0 %v451, 120
    %v2043 = vpop.permute.xlu0 %2042
    %v2044 = vsel %vm473, %v2029, 0
    %v2046 = vsel %vm473, %v2031, 0
    %v2048 = vsel %vm473, %v2033, 0
    %v2050 = vsel %vm473, %v2035, 0
    %v2052 = vsel %vm473, %v2037, 0
    %v2054 = vsel %vm473, %v2039, 0
    %v2056 = vsel %vm473, %v2041, 0
    %v2058 = vsel %vm473, %v2043, 0
    %2060 = vmatpush.xpose.msra.mxu0 0.0
    %2061 = vmatpush.xpose.msra.mxu0 0.0
    %2062 = vmatpush.xpose.msra.mxu0 0.0
    %2063 = vmatpush.xpose.msra.mxu0 0.0
    %2064 = vmatpush.xpose.msra.mxu0 0.0
    %2065 = vmatpush.xpose.msra.mxu0 0.0
    %2066 = vmatpush.xpose.msra.mxu0 0.0
    %2067 = vmatpush.xpose.msra.mxu0 0.0
    %2068 = vmatpush.xpose.msra.mxu0 0.0
    %2069 = vmatpush.xpose.msra.mxu0 0.0
    %2070 = vmatpush.xpose.msra.mxu0 0.0
    %2071 = vmatpush.xpose.msra.mxu0 0.0
    %2072 = vmatpush.xpose.msra.mxu0 %v2058
    %2073 = vmatpush.xpose.msra.mxu0 %v2056
    %2074 = vmatpush.xpose.msra.mxu0 %v2054
    %2075 = vmatpush.xpose.msra.mxu0 %v2052
    %2076 = vmatmul.f32.gmra.mxu0 %v2044
    %v2077 = vpop.f32.mrf.mxu0
    %v2078 = vadd.f32 0.0, %v2077
    %2079 = vmatmul.f32.gmra.mxu0 %v2046
    %v2080 = vpop.f32.mrf.mxu0
    %v2081 = vadd.f32 0.0, %v2080
    %2082 = vmatmul.f32.gmra.mxu0 %v2048
    %v2083 = vpop.f32.mrf.mxu0
    %v2084 = vadd.f32 0.0, %v2083
    %2085 = vmatmul.f32.gmra.mxu0 %v2050
    %v2086 = vpop.f32.mrf.mxu0
    %v2087 = vadd.f32 0.0, %v2086
    %2088 = vdwg.mxu0
    %2089 = vrot.lane.b32.xlu0 %v297, 120
    %v2090 = vpop.permute.xlu0 %2089
    %2091 = vrot.lane.b32.xlu0 %v299, 120
    %v2092 = vpop.permute.xlu0 %2091
    %2093 = vrot.lane.b32.xlu0 %v302, 120
    %v2094 = vpop.permute.xlu0 %2093
    %2095 = vrot.lane.b32.xlu0 %v304, 120
    %v2096 = vpop.permute.xlu0 %2095
    %2097 = vrot.lane.b32.xlu0 %v454, 120
    %v2098 = vpop.permute.xlu0 %2097
    %2099 = vrot.lane.b32.xlu0 %v456, 120
    %v2100 = vpop.permute.xlu0 %2099
    %2101 = vrot.lane.b32.xlu0 %v459, 120
    %v2102 = vpop.permute.xlu0 %2101
    %2103 = vrot.lane.b32.xlu0 %v461, 120
    %v2104 = vpop.permute.xlu0 %2103
    %v2105 = vsel %vm473, %v2090, 0
    %v2107 = vsel %vm473, %v2092, 0
    %v2109 = vsel %vm473, %v2094, 0
    %v2111 = vsel %vm473, %v2096, 0
    %v2113 = vsel %vm473, %v2098, 0
    %v2115 = vsel %vm473, %v2100, 0
    %v2117 = vsel %vm473, %v2102, 0
    %v2119 = vsel %vm473, %v2104, 0
    %2121 = vmatpush.xpose.msra.mxu0 0.0
    %2122 = vmatpush.xpose.msra.mxu0 0.0
    %2123 = vmatpush.xpose.msra.mxu0 0.0
    %2124 = vmatpush.xpose.msra.mxu0 0.0
    %2125 = vmatpush.xpose.msra.mxu0 0.0
    %2126 = vmatpush.xpose.msra.mxu0 0.0
    %2127 = vmatpush.xpose.msra.mxu0 0.0
    %2128 = vmatpush.xpose.msra.mxu0 0.0
    %2129 = vmatpush.xpose.msra.mxu0 0.0
    %2130 = vmatpush.xpose.msra.mxu0 0.0
    %2131 = vmatpush.xpose.msra.mxu0 0.0
    %2132 = vmatpush.xpose.msra.mxu0 0.0
    %2133 = vmatpush.xpose.msra.mxu0 %v2119
    %2134 = vmatpush.xpose.msra.mxu0 %v2117
    %2135 = vmatpush.xpose.msra.mxu0 %v2115
    %2136 = vmatpush.xpose.msra.mxu0 %v2113
    %2137 = vmatmul.f32.gmra.mxu0 %v2105
    %v2138 = vpop.f32.mrf.mxu0
    %v2139 = vadd.f32 0.0, %v2138
    %2140 = vmatmul.f32.gmra.mxu0 %v2107
    %v2141 = vpop.f32.mrf.mxu0
    %v2142 = vadd.f32 0.0, %v2141
    %2143 = vmatmul.f32.gmra.mxu0 %v2109
    %v2144 = vpop.f32.mrf.mxu0
    %v2145 = vadd.f32 0.0, %v2144
    %2146 = vmatmul.f32.gmra.mxu0 %v2111
    %v2147 = vpop.f32.mrf.mxu0
    %v2148 = vadd.f32 0.0, %v2147
    %2149 = vdwg.mxu0
    %2150 = vrot.lane.b32.xlu0 %v307, 120
    %v2151 = vpop.permute.xlu0 %2150
    %2152 = vrot.lane.b32.xlu0 %v309, 120
    %v2153 = vpop.permute.xlu0 %2152
    %2154 = vrot.lane.b32.xlu0 %v312, 120
    %v2155 = vpop.permute.xlu0 %2154
    %2156 = vrot.lane.b32.xlu0 %v314, 120
    %v2157 = vpop.permute.xlu0 %2156
    %2158 = vrot.lane.b32.xlu0 %v464, 120
    %v2159 = vpop.permute.xlu0 %2158
    %2160 = vrot.lane.b32.xlu0 %v466, 120
    %v2161 = vpop.permute.xlu0 %2160
    %2162 = vrot.lane.b32.xlu0 %v469, 120
    %v2163 = vpop.permute.xlu0 %2162
    %2164 = vrot.lane.b32.xlu0 %v471, 120
    %v2165 = vpop.permute.xlu0 %2164
    %v2166 = vsel %vm473, %v2151, 0
    %v2168 = vsel %vm473, %v2153, 0
    %v2170 = vsel %vm473, %v2155, 0
    %v2172 = vsel %vm473, %v2157, 0
    %v2174 = vsel %vm473, %v2159, 0
    %v2176 = vsel %vm473, %v2161, 0
    %v2178 = vsel %vm473, %v2163, 0
    %v2180 = vsel %vm473, %v2165, 0
    %2182 = vmatpush.xpose.msra.mxu0 0.0
    %2183 = vmatpush.xpose.msra.mxu0 0.0
    %2184 = vmatpush.xpose.msra.mxu0 0.0
    %2185 = vmatpush.xpose.msra.mxu0 0.0
    %2186 = vmatpush.xpose.msra.mxu0 0.0
    %2187 = vmatpush.xpose.msra.mxu0 0.0
    %2188 = vmatpush.xpose.msra.mxu0 0.0
    %2189 = vmatpush.xpose.msra.mxu0 0.0
    %2190 = vmatpush.xpose.msra.mxu0 0.0
    %2191 = vmatpush.xpose.msra.mxu0 0.0
    %2192 = vmatpush.xpose.msra.mxu0 0.0
    %2193 = vmatpush.xpose.msra.mxu0 0.0
    %2194 = vmatpush.xpose.msra.mxu0 %v2180
    %2195 = vmatpush.xpose.msra.mxu0 %v2178
    %2196 = vmatpush.xpose.msra.mxu0 %v2176
    %2197 = vmatpush.xpose.msra.mxu0 %v2174
    %2198 = vmatmul.f32.gmra.mxu0 %v2166
    %v2199 = vpop.f32.mrf.mxu0
    %v2200 = vadd.f32 0.0, %v2199
    %2201 = vmatmul.f32.gmra.mxu0 %v2168
    %v2202 = vpop.f32.mrf.mxu0
    %v2203 = vadd.f32 0.0, %v2202
    %2204 = vmatmul.f32.gmra.mxu0 %v2170
    %v2205 = vpop.f32.mrf.mxu0
    %v2206 = vadd.f32 0.0, %v2205
    %2207 = vmatmul.f32.gmra.mxu0 %v2172
    %v2208 = vpop.f32.mrf.mxu0
    %v2209 = vadd.f32 0.0, %v2208
    %2210 = vdwg.mxu0
    %v2211 = vsel %vm898, %v1773, -inf
    %2212 = vmax.xlane.f32.xlu0 %v2211
    %v2213 = vpop.xlane.xlu0 %2212
    %v2214 = vsel %vm898, %v1776, -inf
    %2215 = vmax.xlane.f32.xlu0 %v2214
    %v2216 = vpop.xlane.xlu0 %2215
    %v2217 = vsel %vm898, %v1779, -inf
    %2218 = vmax.xlane.f32.xlu0 %v2217
    %v2219 = vpop.xlane.xlu0 %2218
    %v2220 = vsel %vm898, %v1782, -inf
    %2221 = vmax.xlane.f32.xlu0 %v2220
    %v2222 = vpop.xlane.xlu0 %2221
    %v2223 = vsel %vm898, %v1834, -inf
    %2224 = vmax.xlane.f32.xlu0 %v2223
    %v2225 = vpop.xlane.xlu0 %2224
    %v2226 = vsel %vm898, %v1837, -inf
    %2227 = vmax.xlane.f32.xlu0 %v2226
    %v2228 = vpop.xlane.xlu0 %2227
    %v2229 = vsel %vm898, %v1840, -inf
    %2230 = vmax.xlane.f32.xlu0 %v2229
    %v2231 = vpop.xlane.xlu0 %2230
    %v2232 = vsel %vm898, %v1843, -inf
    %2233 = vmax.xlane.f32.xlu0 %v2232
    %v2234 = vpop.xlane.xlu0 %2233
    %v2235 = vsel %vm898, %v1895, -inf
    %2236 = vmax.xlane.f32.xlu0 %v2235
    %v2237 = vpop.xlane.xlu0 %2236
    %v2238 = vsel %vm898, %v1898, -inf
    %2239 = vmax.xlane.f32.xlu0 %v2238
    %v2240 = vpop.xlane.xlu0 %2239
    %v2241 = vsel %vm898, %v1901, -inf
    %2242 = vmax.xlane.f32.xlu0 %v2241
    %v2243 = vpop.xlane.xlu0 %2242
    %v2244 = vsel %vm898, %v1904, -inf
    %2245 = vmax.xlane.f32.xlu0 %v2244
    %v2246 = vpop.xlane.xlu0 %2245
    %v2247 = vsel %vm898, %v1956, -inf
    %2248 = vmax.xlane.f32.xlu0 %v2247
    %v2249 = vpop.xlane.xlu0 %2248
    %v2250 = vsel %vm898, %v1959, -inf
    %2251 = vmax.xlane.f32.xlu0 %v2250
    %v2252 = vpop.xlane.xlu0 %2251
    %v2253 = vsel %vm898, %v1962, -inf
    %2254 = vmax.xlane.f32.xlu0 %v2253
    %v2255 = vpop.xlane.xlu0 %2254
    %v2256 = vsel %vm898, %v1965, -inf
    %2257 = vmax.xlane.f32.xlu0 %v2256
    %v2258 = vpop.xlane.xlu0 %2257
    %v2259 = vsel %vm898, %v2017, -inf
    %2260 = vmax.xlane.f32.xlu0 %v2259
    %v2261 = vpop.xlane.xlu0 %2260
    %v2262 = vsel %vm898, %v2020, -inf
    %2263 = vmax.xlane.f32.xlu0 %v2262
    %v2264 = vpop.xlane.xlu0 %2263
    %v2265 = vsel %vm898, %v2023, -inf
    %2266 = vmax.xlane.f32.xlu0 %v2265
    %v2267 = vpop.xlane.xlu0 %2266
    %v2268 = vsel %vm898, %v2026, -inf
    %2269 = vmax.xlane.f32.xlu0 %v2268
    %v2270 = vpop.xlane.xlu0 %2269
    %v2271 = vsel %vm898, %v2078, -inf
    %2272 = vmax.xlane.f32.xlu0 %v2271
    %v2273 = vpop.xlane.xlu0 %2272
    %v2274 = vsel %vm898, %v2081, -inf
    %2275 = vmax.xlane.f32.xlu0 %v2274
    %v2276 = vpop.xlane.xlu0 %2275
    %v2277 = vsel %vm898, %v2084, -inf
    %2278 = vmax.xlane.f32.xlu0 %v2277
    %v2279 = vpop.xlane.xlu0 %2278
    %v2280 = vsel %vm898, %v2087, -inf
    %2281 = vmax.xlane.f32.xlu0 %v2280
    %v2282 = vpop.xlane.xlu0 %2281
    %v2283 = vsel %vm898, %v2139, -inf
    %2284 = vmax.xlane.f32.xlu0 %v2283
    %v2285 = vpop.xlane.xlu0 %2284
    %v2286 = vsel %vm898, %v2142, -inf
    %2287 = vmax.xlane.f32.xlu0 %v2286
    %v2288 = vpop.xlane.xlu0 %2287
    %v2289 = vsel %vm898, %v2145, -inf
    %2290 = vmax.xlane.f32.xlu0 %v2289
    %v2291 = vpop.xlane.xlu0 %2290
    %v2292 = vsel %vm898, %v2148, -inf
    %2293 = vmax.xlane.f32.xlu0 %v2292
    %v2294 = vpop.xlane.xlu0 %2293
    %v2295 = vsel %vm898, %v2200, -inf
    %2296 = vmax.xlane.f32.xlu0 %v2295
    %v2297 = vpop.xlane.xlu0 %2296
    %v2298 = vsel %vm898, %v2203, -inf
    %2299 = vmax.xlane.f32.xlu0 %v2298
    %v2300 = vpop.xlane.xlu0 %2299
    %v2301 = vsel %vm898, %v2206, -inf
    %2302 = vmax.xlane.f32.xlu0 %v2301
    %v2303 = vpop.xlane.xlu0 %2302
    %v2304 = vsel %vm898, %v2209, -inf
    %2305 = vmax.xlane.f32.xlu0 %v2304
    %v2306 = vpop.xlane.xlu0 %2305
    %v2307 = vsub.f32 %v1773, %v2213
    %v2308 = vsub.f32 %v1776, %v2216
    %v2309 = vsub.f32 %v1779, %v2219
    %v2310 = vsub.f32 %v1782, %v2222
    %v2311 = vsub.f32 %v1834, %v2225
    %v2312 = vsub.f32 %v1837, %v2228
    %v2313 = vsub.f32 %v1840, %v2231
    %v2314 = vsub.f32 %v1843, %v2234
    %v2315 = vsub.f32 %v1895, %v2237
    %v2316 = vsub.f32 %v1898, %v2240
    %v2317 = vsub.f32 %v1901, %v2243
    %v2318 = vsub.f32 %v1904, %v2246
    %v2319 = vsub.f32 %v1956, %v2249
    %v2320 = vsub.f32 %v1959, %v2252
    %v2321 = vsub.f32 %v1962, %v2255
    %v2322 = vsub.f32 %v1965, %v2258
    %v2323 = vsub.f32 %v2017, %v2261
    %v2324 = vsub.f32 %v2020, %v2264
    %v2325 = vsub.f32 %v2023, %v2267
    %v2326 = vsub.f32 %v2026, %v2270
    %v2327 = vsub.f32 %v2078, %v2273
    %v2328 = vsub.f32 %v2081, %v2276
    %v2329 = vsub.f32 %v2084, %v2279
    %v2330 = vsub.f32 %v2087, %v2282
    %v2331 = vsub.f32 %v2139, %v2285
    %v2332 = vsub.f32 %v2142, %v2288
    %v2333 = vsub.f32 %v2145, %v2291
    %v2334 = vsub.f32 %v2148, %v2294
    %v2335 = vsub.f32 %v2200, %v2297
    %v2336 = vsub.f32 %v2203, %v2300
    %v2337 = vsub.f32 %v2206, %v2303
    %v2338 = vsub.f32 %v2209, %v2306
    %v2339 = vmul.f32 %v2307, 1.442695
    %v2340 = vpow.pop %v2339
    %v2341 = vmul.f32 %v2308, 1.442695
    %v2342 = vpow.pop %v2341
    %v2343 = vmul.f32 %v2309, 1.442695
    %v2344 = vpow.pop %v2343
    %v2345 = vmul.f32 %v2310, 1.442695
    %v2346 = vpow.pop %v2345
    %v2347 = vmul.f32 %v2311, 1.442695
    %v2348 = vpow.pop %v2347
    %v2349 = vmul.f32 %v2312, 1.442695
    %v2350 = vpow.pop %v2349
    %v2351 = vmul.f32 %v2313, 1.442695
    %v2352 = vpow.pop %v2351
    %v2353 = vmul.f32 %v2314, 1.442695
    %v2354 = vpow.pop %v2353
    %v2355 = vmul.f32 %v2315, 1.442695
    %v2356 = vpow.pop %v2355
    %v2357 = vmul.f32 %v2316, 1.442695
    %v2358 = vpow.pop %v2357
    %v2359 = vmul.f32 %v2317, 1.442695
    %v2360 = vpow.pop %v2359
    %v2361 = vmul.f32 %v2318, 1.442695
    %v2362 = vpow.pop %v2361
    %v2363 = vmul.f32 %v2319, 1.442695
    %v2364 = vpow.pop %v2363
    %v2365 = vmul.f32 %v2320, 1.442695
    %v2366 = vpow.pop %v2365
    %v2367 = vmul.f32 %v2321, 1.442695
    %v2368 = vpow.pop %v2367
    %v2369 = vmul.f32 %v2322, 1.442695
    %v2370 = vpow.pop %v2369
    %v2371 = vmul.f32 %v2323, 1.442695
    %v2372 = vpow.pop %v2371
    %v2373 = vmul.f32 %v2324, 1.442695
    %v2374 = vpow.pop %v2373
    %v2375 = vmul.f32 %v2325, 1.442695
    %v2376 = vpow.pop %v2375
    %v2377 = vmul.f32 %v2326, 1.442695
    %v2378 = vpow.pop %v2377
    %v2379 = vmul.f32 %v2327, 1.442695
    %v2380 = vpow.pop %v2379
    %v2381 = vmul.f32 %v2328, 1.442695
    %v2382 = vpow.pop %v2381
    %v2383 = vmul.f32 %v2329, 1.442695
    %v2384 = vpow.pop %v2383
    %v2385 = vmul.f32 %v2330, 1.442695
    %v2386 = vpow.pop %v2385
    %v2387 = vmul.f32 %v2331, 1.442695
    %v2388 = vpow.pop %v2387
    %v2389 = vmul.f32 %v2332, 1.442695
    %v2390 = vpow.pop %v2389
    %v2391 = vmul.f32 %v2333, 1.442695
    %v2392 = vpow.pop %v2391
    %v2393 = vmul.f32 %v2334, 1.442695
    %v2394 = vpow.pop %v2393
    %v2395 = vmul.f32 %v2335, 1.442695
    %v2396 = vpow.pop %v2395
    %v2397 = vmul.f32 %v2336, 1.442695
    %v2398 = vpow.pop %v2397
    %v2399 = vmul.f32 %v2337, 1.442695
    %v2400 = vpow.pop %v2399
    %v2401 = vmul.f32 %v2338, 1.442695
    %v2402 = vpow.pop %v2401
    %v2403 = vsel %vm898, %v2340, 0.0
    %2404 = vadd.xlane.f32.xlu0 %v2403
    %v2405 = vpop.xlane.xlu0 %2404
    %v2406 = vsel %vm898, %v2342, 0.0
    %2407 = vadd.xlane.f32.xlu0 %v2406
    %v2408 = vpop.xlane.xlu0 %2407
    %v2409 = vsel %vm898, %v2344, 0.0
    %2410 = vadd.xlane.f32.xlu0 %v2409
    %v2411 = vpop.xlane.xlu0 %2410
    %v2412 = vsel %vm898, %v2346, 0.0
    %2413 = vadd.xlane.f32.xlu0 %v2412
    %v2414 = vpop.xlane.xlu0 %2413
    %v2415 = vsel %vm898, %v2348, 0.0
    %2416 = vadd.xlane.f32.xlu0 %v2415
    %v2417 = vpop.xlane.xlu0 %2416
    %v2418 = vsel %vm898, %v2350, 0.0
    %2419 = vadd.xlane.f32.xlu0 %v2418
    %v2420 = vpop.xlane.xlu0 %2419
    %v2421 = vsel %vm898, %v2352, 0.0
    %2422 = vadd.xlane.f32.xlu0 %v2421
    %v2423 = vpop.xlane.xlu0 %2422
    %v2424 = vsel %vm898, %v2354, 0.0
    %2425 = vadd.xlane.f32.xlu0 %v2424
    %v2426 = vpop.xlane.xlu0 %2425
    %v2427 = vsel %vm898, %v2356, 0.0
    %2428 = vadd.xlane.f32.xlu0 %v2427
    %v2429 = vpop.xlane.xlu0 %2428
    %v2430 = vsel %vm898, %v2358, 0.0
    %2431 = vadd.xlane.f32.xlu0 %v2430
    %v2432 = vpop.xlane.xlu0 %2431
    %v2433 = vsel %vm898, %v2360, 0.0
    %2434 = vadd.xlane.f32.xlu0 %v2433
    %v2435 = vpop.xlane.xlu0 %2434
    %v2436 = vsel %vm898, %v2362, 0.0
    %2437 = vadd.xlane.f32.xlu0 %v2436
    %v2438 = vpop.xlane.xlu0 %2437
    %v2439 = vsel %vm898, %v2364, 0.0
    %2440 = vadd.xlane.f32.xlu0 %v2439
    %v2441 = vpop.xlane.xlu0 %2440
    %v2442 = vsel %vm898, %v2366, 0.0
    %2443 = vadd.xlane.f32.xlu0 %v2442
    %v2444 = vpop.xlane.xlu0 %2443
    %v2445 = vsel %vm898, %v2368, 0.0
    %2446 = vadd.xlane.f32.xlu0 %v2445
    %v2447 = vpop.xlane.xlu0 %2446
    %v2448 = vsel %vm898, %v2370, 0.0
    %2449 = vadd.xlane.f32.xlu0 %v2448
    %v2450 = vpop.xlane.xlu0 %2449
    %v2451 = vsel %vm898, %v2372, 0.0
    %2452 = vadd.xlane.f32.xlu0 %v2451
    %v2453 = vpop.xlane.xlu0 %2452
    %v2454 = vsel %vm898, %v2374, 0.0
    %2455 = vadd.xlane.f32.xlu0 %v2454
    %v2456 = vpop.xlane.xlu0 %2455
    %v2457 = vsel %vm898, %v2376, 0.0
    %2458 = vadd.xlane.f32.xlu0 %v2457
    %v2459 = vpop.xlane.xlu0 %2458
    %v2460 = vsel %vm898, %v2378, 0.0
    %2461 = vadd.xlane.f32.xlu0 %v2460
    %v2462 = vpop.xlane.xlu0 %2461
    %v2463 = vsel %vm898, %v2380, 0.0
    %2464 = vadd.xlane.f32.xlu0 %v2463
    %v2465 = vpop.xlane.xlu0 %2464
    %v2466 = vsel %vm898, %v2382, 0.0
    %2467 = vadd.xlane.f32.xlu0 %v2466
    %v2468 = vpop.xlane.xlu0 %2467
    %v2469 = vsel %vm898, %v2384, 0.0
    %2470 = vadd.xlane.f32.xlu0 %v2469
    %v2471 = vpop.xlane.xlu0 %2470
    %v2472 = vsel %vm898, %v2386, 0.0
    %2473 = vadd.xlane.f32.xlu0 %v2472
    %v2474 = vpop.xlane.xlu0 %2473
    %v2475 = vsel %vm898, %v2388, 0.0
    %2476 = vadd.xlane.f32.xlu0 %v2475
    %v2477 = vpop.xlane.xlu0 %2476
    %v2478 = vsel %vm898, %v2390, 0.0
    %2479 = vadd.xlane.f32.xlu0 %v2478
    %v2480 = vpop.xlane.xlu0 %2479
    %v2481 = vsel %vm898, %v2392, 0.0
    %2482 = vadd.xlane.f32.xlu0 %v2481
    %v2483 = vpop.xlane.xlu0 %2482
    %v2484 = vsel %vm898, %v2394, 0.0
    %2485 = vadd.xlane.f32.xlu0 %v2484
    %v2486 = vpop.xlane.xlu0 %2485
    %v2487 = vsel %vm898, %v2396, 0.0
    %2488 = vadd.xlane.f32.xlu0 %v2487
    %v2489 = vpop.xlane.xlu0 %2488
    %v2490 = vsel %vm898, %v2398, 0.0
    %2491 = vadd.xlane.f32.xlu0 %v2490
    %v2492 = vpop.xlane.xlu0 %2491
    %v2493 = vsel %vm898, %v2400, 0.0
    %2494 = vadd.xlane.f32.xlu0 %v2493
    %v2495 = vpop.xlane.xlu0 %2494
    %v2496 = vsel %vm898, %v2402, 0.0
    %2497 = vadd.xlane.f32.xlu0 %v2496
    %v2498 = vpop.xlane.xlu0 %2497
    %v2499 = vrcp.pop %v2405
    %v2500 = vrcp.pop %v2408
    %v2501 = vrcp.pop %v2411
    %v2502 = vrcp.pop %v2414
    %v2503 = vrcp.pop %v2417
    %v2504 = vrcp.pop %v2420
    %v2505 = vrcp.pop %v2423
    %v2506 = vrcp.pop %v2426
    %v2507 = vrcp.pop %v2429
    %v2508 = vrcp.pop %v2432
    %v2509 = vrcp.pop %v2435
    %v2510 = vrcp.pop %v2438
    %v2511 = vrcp.pop %v2441
    %v2512 = vrcp.pop %v2444
    %v2513 = vrcp.pop %v2447
    %v2514 = vrcp.pop %v2450
    %v2515 = vrcp.pop %v2453
    %v2516 = vrcp.pop %v2456
    %v2517 = vrcp.pop %v2459
    %v2518 = vrcp.pop %v2462
    %v2519 = vrcp.pop %v2465
    %v2520 = vrcp.pop %v2468
    %v2521 = vrcp.pop %v2471
    %v2522 = vrcp.pop %v2474
    %v2523 = vrcp.pop %v2477
    %v2524 = vrcp.pop %v2480
    %v2525 = vrcp.pop %v2483
    %v2526 = vrcp.pop %v2486
    %v2527 = vrcp.pop %v2489
    %v2528 = vrcp.pop %v2492
    %v2529 = vrcp.pop %v2495
    %v2530 = vrcp.pop %v2498
    %v2531 = vmul.f32 %v2340, %v2499
    %v2532 = vmul.f32 %v2342, %v2500
    %v2533 = vmul.f32 %v2344, %v2501
    %v2534 = vmul.f32 %v2346, %v2502
    %v2535 = vmul.f32 %v2348, %v2503
    %v2536 = vmul.f32 %v2350, %v2504
    %v2537 = vmul.f32 %v2352, %v2505
    %v2538 = vmul.f32 %v2354, %v2506
    %v2539 = vmul.f32 %v2356, %v2507
    %v2540 = vmul.f32 %v2358, %v2508
    %v2541 = vmul.f32 %v2360, %v2509
    %v2542 = vmul.f32 %v2362, %v2510
    %v2543 = vmul.f32 %v2364, %v2511
    %v2544 = vmul.f32 %v2366, %v2512
    %v2545 = vmul.f32 %v2368, %v2513
    %v2546 = vmul.f32 %v2370, %v2514
    %v2547 = vmul.f32 %v2372, %v2515
    %v2548 = vmul.f32 %v2374, %v2516
    %v2549 = vmul.f32 %v2376, %v2517
    %v2550 = vmul.f32 %v2378, %v2518
    %v2551 = vmul.f32 %v2380, %v2519
    %v2552 = vmul.f32 %v2382, %v2520
    %v2553 = vmul.f32 %v2384, %v2521
    %v2554 = vmul.f32 %v2386, %v2522
    %v2555 = vmul.f32 %v2388, %v2523
    %v2556 = vmul.f32 %v2390, %v2524
    %v2557 = vmul.f32 %v2392, %v2525
    %v2558 = vmul.f32 %v2394, %v2526
    %v2559 = vmul.f32 %v2396, %v2527
    %v2560 = vmul.f32 %v2398, %v2528
    %v2561 = vmul.f32 %v2400, %v2529
    %v2562 = vmul.f32 %v2402, %v2530
    %v2563 = vpack.c.bf16 %v2531, %v2531
    %v2564 = vpack.c.bf16 %v2532, %v2532
    %v2565 = vpack.c.bf16 %v2533, %v2533
    %v2566 = vpack.c.bf16 %v2534, %v2534
    %v2567 = vpack.c.bf16 %v2535, %v2535
    %v2568 = vpack.c.bf16 %v2536, %v2536
    %v2569 = vpack.c.bf16 %v2537, %v2537
    %v2570 = vpack.c.bf16 %v2538, %v2538
    %v2571 = vpack.c.bf16 %v2539, %v2539
    %v2572 = vpack.c.bf16 %v2540, %v2540
    %v2573 = vpack.c.bf16 %v2541, %v2541
    %v2574 = vpack.c.bf16 %v2542, %v2542
    %v2575 = vpack.c.bf16 %v2543, %v2543
    %v2576 = vpack.c.bf16 %v2544, %v2544
    %v2577 = vpack.c.bf16 %v2545, %v2545
    %v2578 = vpack.c.bf16 %v2546, %v2546
    %v2579 = vpack.c.bf16 %v2547, %v2547
    %v2580 = vpack.c.bf16 %v2548, %v2548
    %v2581 = vpack.c.bf16 %v2549, %v2549
    %v2582 = vpack.c.bf16 %v2550, %v2550
    %v2583 = vpack.c.bf16 %v2551, %v2551
    %v2584 = vpack.c.bf16 %v2552, %v2552
    %v2585 = vpack.c.bf16 %v2553, %v2553
    %v2586 = vpack.c.bf16 %v2554, %v2554
    %v2587 = vpack.c.bf16 %v2555, %v2555
    %v2588 = vpack.c.bf16 %v2556, %v2556
    %v2589 = vpack.c.bf16 %v2557, %v2557
    %v2590 = vpack.c.bf16 %v2558, %v2558
    %v2591 = vpack.c.bf16 %v2559, %v2559
    %v2592 = vpack.c.bf16 %v2560, %v2560
    %v2593 = vpack.c.bf16 %v2561, %v2561
    %v2594 = vpack.c.bf16 %v2562, %v2562
    %v2599 = vunpack.c.l.b16 %v2563
    %v2600 = vunpack.c.l.b16 %v2564
    %v2601 = vunpack.c.l.b16 %v2565
    %v2602 = vunpack.c.l.b16 %v2566
    %v2603 = vpack.c.b16 %v2600, %v2599
    %v2604 = vpack.c.b16 %v2602, %v2601
    %2605 = vrot.lane.b32.xlu0 %v1333, 104
    %v2606 = vpop.permute.xlu0 %2605
    %2607 = vrot.lane.b32.xlu0 %v1334, 104
    %v2608 = vpop.permute.xlu0 %2607
    %v2612 = vsel %vm898, %v2603, 0
    %v2615 = vsel %vm898, %v2604, 0
    %2617 = vmatpush.bf16.msra.mxu0 0
    %2618 = vmatpush.bf16.msra.mxu0 0
    %2619 = vmatpush.bf16.msra.mxu0 0
    %2620 = vmatpush.bf16.msra.mxu0 0
    %2621 = vmatpush.bf16.msra.mxu0 0
    %2622 = vmatpush.bf16.msra.mxu0 0
    %2623 = vmatpush.bf16.msra.mxu0 %v2608
    %2624 = vmatpush.bf16.msra.mxu0 %v2606
    %2625 = vmatmul.bf16.gmra.mxu0 %v2612
    %v2626 = vpop.f32.mrf.mxu0
    %v2627 = vadd.f32 0.0, %v2626
    %v2628 = vpop.f32.mrf.mxu0
    %v2629 = vadd.f32 0.0, %v2628
    %2630 = vmatmul.bf16.gmra.mxu0 %v2615
    %v2631 = vpop.f32.mrf.mxu0
    %v2632 = vadd.f32 0.0, %v2631
    %v2633 = vpop.f32.mrf.mxu0
    %v2634 = vadd.f32 0.0, %v2633
    %2635 = vdwg.mxu0
    %v2640 = vunpack.c.l.b16 %v2567
    %v2641 = vunpack.c.l.b16 %v2568
    %v2642 = vunpack.c.l.b16 %v2569
    %v2643 = vunpack.c.l.b16 %v2570
    %v2644 = vpack.c.b16 %v2641, %v2640
    %v2645 = vpack.c.b16 %v2643, %v2642
    %2646 = vrot.lane.b32.xlu0 %v1384, 104
    %v2647 = vpop.permute.xlu0 %2646
    %2648 = vrot.lane.b32.xlu0 %v1385, 104
    %v2649 = vpop.permute.xlu0 %2648
    %v2653 = vsel %vm898, %v2644, 0
    %v2656 = vsel %vm898, %v2645, 0
    %2658 = vmatpush.bf16.msra.mxu0 0
    %2659 = vmatpush.bf16.msra.mxu0 0
    %2660 = vmatpush.bf16.msra.mxu0 0
    %2661 = vmatpush.bf16.msra.mxu0 0
    %2662 = vmatpush.bf16.msra.mxu0 0
    %2663 = vmatpush.bf16.msra.mxu0 0
    %2664 = vmatpush.bf16.msra.mxu0 %v2649
    %2665 = vmatpush.bf16.msra.mxu0 %v2647
    %2666 = vmatmul.bf16.gmra.mxu0 %v2653
    %v2667 = vpop.f32.mrf.mxu0
    %v2668 = vadd.f32 0.0, %v2667
    %v2669 = vpop.f32.mrf.mxu0
    %v2670 = vadd.f32 0.0, %v2669
    %2671 = vmatmul.bf16.gmra.mxu0 %v2656
    %v2672 = vpop.f32.mrf.mxu0
    %v2673 = vadd.f32 0.0, %v2672
    %v2674 = vpop.f32.mrf.mxu0
    %v2675 = vadd.f32 0.0, %v2674
    %2676 = vdwg.mxu0
    %v2681 = vunpack.c.l.b16 %v2571
    %v2682 = vunpack.c.l.b16 %v2572
    %v2683 = vunpack.c.l.b16 %v2573
    %v2684 = vunpack.c.l.b16 %v2574
    %v2685 = vpack.c.b16 %v2682, %v2681
    %v2686 = vpack.c.b16 %v2684, %v2683
    %2687 = vrot.lane.b32.xlu0 %v1435, 104
    %v2688 = vpop.permute.xlu0 %2687
    %2689 = vrot.lane.b32.xlu0 %v1436, 104
    %v2690 = vpop.permute.xlu0 %2689
    %v2694 = vsel %vm898, %v2685, 0
    %v2697 = vsel %vm898, %v2686, 0
    %2699 = vmatpush.bf16.msra.mxu0 0
    %2700 = vmatpush.bf16.msra.mxu0 0
    %2701 = vmatpush.bf16.msra.mxu0 0
    %2702 = vmatpush.bf16.msra.mxu0 0
    %2703 = vmatpush.bf16.msra.mxu0 0
    %2704 = vmatpush.bf16.msra.mxu0 0
    %2705 = vmatpush.bf16.msra.mxu0 %v2690
    %2706 = vmatpush.bf16.msra.mxu0 %v2688
    %2707 = vmatmul.bf16.gmra.mxu0 %v2694
    %v2708 = vpop.f32.mrf.mxu0
    %v2709 = vadd.f32 0.0, %v2708
    %v2710 = vpop.f32.mrf.mxu0
    %v2711 = vadd.f32 0.0, %v2710
    %2712 = vmatmul.bf16.gmra.mxu0 %v2697
    %v2713 = vpop.f32.mrf.mxu0
    %v2714 = vadd.f32 0.0, %v2713
    %v2715 = vpop.f32.mrf.mxu0
    %v2716 = vadd.f32 0.0, %v2715
    %2717 = vdwg.mxu0
    %v2722 = vunpack.c.l.b16 %v2575
    %v2723 = vunpack.c.l.b16 %v2576
    %v2724 = vunpack.c.l.b16 %v2577
    %v2725 = vunpack.c.l.b16 %v2578
    %v2726 = vpack.c.b16 %v2723, %v2722
    %v2727 = vpack.c.b16 %v2725, %v2724
    %2728 = vrot.lane.b32.xlu0 %v1486, 104
    %v2729 = vpop.permute.xlu0 %2728
    %2730 = vrot.lane.b32.xlu0 %v1487, 104
    %v2731 = vpop.permute.xlu0 %2730
    %v2735 = vsel %vm898, %v2726, 0
    %v2738 = vsel %vm898, %v2727, 0
    %2740 = vmatpush.bf16.msra.mxu0 0
    %2741 = vmatpush.bf16.msra.mxu0 0
    %2742 = vmatpush.bf16.msra.mxu0 0
    %2743 = vmatpush.bf16.msra.mxu0 0
    %2744 = vmatpush.bf16.msra.mxu0 0
    %2745 = vmatpush.bf16.msra.mxu0 0
    %2746 = vmatpush.bf16.msra.mxu0 %v2731
    %2747 = vmatpush.bf16.msra.mxu0 %v2729
    %2748 = vmatmul.bf16.gmra.mxu0 %v2735
    %v2749 = vpop.f32.mrf.mxu0
    %v2750 = vadd.f32 0.0, %v2749
    %v2751 = vpop.f32.mrf.mxu0
    %v2752 = vadd.f32 0.0, %v2751
    %2753 = vmatmul.bf16.gmra.mxu0 %v2738
    %v2754 = vpop.f32.mrf.mxu0
    %v2755 = vadd.f32 0.0, %v2754
    %v2756 = vpop.f32.mrf.mxu0
    %v2757 = vadd.f32 0.0, %v2756
    %2758 = vdwg.mxu0
    %v2763 = vunpack.c.l.b16 %v2579
    %v2764 = vunpack.c.l.b16 %v2580
    %v2765 = vunpack.c.l.b16 %v2581
    %v2766 = vunpack.c.l.b16 %v2582
    %v2767 = vpack.c.b16 %v2764, %v2763
    %v2768 = vpack.c.b16 %v2766, %v2765
    %2769 = vrot.lane.b32.xlu0 %v1537, 104
    %v2770 = vpop.permute.xlu0 %2769
    %2771 = vrot.lane.b32.xlu0 %v1538, 104
    %v2772 = vpop.permute.xlu0 %2771
    %v2776 = vsel %vm898, %v2767, 0
    %v2779 = vsel %vm898, %v2768, 0
    %2781 = vmatpush.bf16.msra.mxu0 0
    %2782 = vmatpush.bf16.msra.mxu0 0
    %2783 = vmatpush.bf16.msra.mxu0 0
    %2784 = vmatpush.bf16.msra.mxu0 0
    %2785 = vmatpush.bf16.msra.mxu0 0
    %2786 = vmatpush.bf16.msra.mxu0 0
    %2787 = vmatpush.bf16.msra.mxu0 %v2772
    %2788 = vmatpush.bf16.msra.mxu0 %v2770
    %2789 = vmatmul.bf16.gmra.mxu0 %v2776
    %v2790 = vpop.f32.mrf.mxu0
    %v2791 = vadd.f32 0.0, %v2790
    %v2792 = vpop.f32.mrf.mxu0
    %v2793 = vadd.f32 0.0, %v2792
    %2794 = vmatmul.bf16.gmra.mxu0 %v2779
    %v2795 = vpop.f32.mrf.mxu0
    %v2796 = vadd.f32 0.0, %v2795
    %v2797 = vpop.f32.mrf.mxu0
    %v2798 = vadd.f32 0.0, %v2797
    %2799 = vdwg.mxu0
    %v2804 = vunpack.c.l.b16 %v2583
    %v2805 = vunpack.c.l.b16 %v2584
    %v2806 = vunpack.c.l.b16 %v2585
    %v2807 = vunpack.c.l.b16 %v2586
    %v2808 = vpack.c.b16 %v2805, %v2804
    %v2809 = vpack.c.b16 %v2807, %v2806
    %2810 = vrot.lane.b32.xlu0 %v1588, 104
    %v2811 = vpop.permute.xlu0 %2810
    %2812 = vrot.lane.b32.xlu0 %v1589, 104
    %v2813 = vpop.permute.xlu0 %2812
    %v2817 = vsel %vm898, %v2808, 0
    %v2820 = vsel %vm898, %v2809, 0
    %2822 = vmatpush.bf16.msra.mxu0 0
    %2823 = vmatpush.bf16.msra.mxu0 0
    %2824 = vmatpush.bf16.msra.mxu0 0
    %2825 = vmatpush.bf16.msra.mxu0 0
    %2826 = vmatpush.bf16.msra.mxu0 0
    %2827 = vmatpush.bf16.msra.mxu0 0
    %2828 = vmatpush.bf16.msra.mxu0 %v2813
    %2829 = vmatpush.bf16.msra.mxu0 %v2811
    %2830 = vmatmul.bf16.gmra.mxu0 %v2817
    %v2831 = vpop.f32.mrf.mxu0
    %v2832 = vadd.f32 0.0, %v2831
    %v2833 = vpop.f32.mrf.mxu0
    %v2834 = vadd.f32 0.0, %v2833
    %2835 = vmatmul.bf16.gmra.mxu0 %v2820
    %v2836 = vpop.f32.mrf.mxu0
    %v2837 = vadd.f32 0.0, %v2836
    %v2838 = vpop.f32.mrf.mxu0
    %v2839 = vadd.f32 0.0, %v2838
    %2840 = vdwg.mxu0
    %v2845 = vunpack.c.l.b16 %v2587
    %v2846 = vunpack.c.l.b16 %v2588
    %v2847 = vunpack.c.l.b16 %v2589
    %v2848 = vunpack.c.l.b16 %v2590
    %v2849 = vpack.c.b16 %v2846, %v2845
    %v2850 = vpack.c.b16 %v2848, %v2847
    %2851 = vrot.lane.b32.xlu0 %v1639, 104
    %v2852 = vpop.permute.xlu0 %2851
    %2853 = vrot.lane.b32.xlu0 %v1640, 104
    %v2854 = vpop.permute.xlu0 %2853
    %v2858 = vsel %vm898, %v2849, 0
    %v2861 = vsel %vm898, %v2850, 0
    %2863 = vmatpush.bf16.msra.mxu0 0
    %2864 = vmatpush.bf16.msra.mxu0 0
    %2865 = vmatpush.bf16.msra.mxu0 0
    %2866 = vmatpush.bf16.msra.mxu0 0
    %2867 = vmatpush.bf16.msra.mxu0 0
    %2868 = vmatpush.bf16.msra.mxu0 0
    %2869 = vmatpush.bf16.msra.mxu0 %v2854
    %2870 = vmatpush.bf16.msra.mxu0 %v2852
    %2871 = vmatmul.bf16.gmra.mxu0 %v2858
    %v2872 = vpop.f32.mrf.mxu0
    %v2873 = vadd.f32 0.0, %v2872
    %v2874 = vpop.f32.mrf.mxu0
    %v2875 = vadd.f32 0.0, %v2874
    %2876 = vmatmul.bf16.gmra.mxu0 %v2861
    %v2877 = vpop.f32.mrf.mxu0
    %v2878 = vadd.f32 0.0, %v2877
    %v2879 = vpop.f32.mrf.mxu0
    %v2880 = vadd.f32 0.0, %v2879
    %2881 = vdwg.mxu0
    %v2886 = vunpack.c.l.b16 %v2591
    %v2887 = vunpack.c.l.b16 %v2592
    %v2888 = vunpack.c.l.b16 %v2593
    %v2889 = vunpack.c.l.b16 %v2594
    %v2890 = vpack.c.b16 %v2887, %v2886
    %v2891 = vpack.c.b16 %v2889, %v2888
    %2892 = vrot.lane.b32.xlu0 %v1690, 104
    %v2893 = vpop.permute.xlu0 %2892
    %2894 = vrot.lane.b32.xlu0 %v1691, 104
    %v2895 = vpop.permute.xlu0 %2894
    %v2899 = vsel %vm898, %v2890, 0
    %v2902 = vsel %vm898, %v2891, 0
    %2904 = vmatpush.bf16.msra.mxu0 0
    %2905 = vmatpush.bf16.msra.mxu0 0
    %2906 = vmatpush.bf16.msra.mxu0 0
    %2907 = vmatpush.bf16.msra.mxu0 0
    %2908 = vmatpush.bf16.msra.mxu0 0
    %2909 = vmatpush.bf16.msra.mxu0 0
    %2910 = vmatpush.bf16.msra.mxu0 %v2895
    %2911 = vmatpush.bf16.msra.mxu0 %v2893
    %2912 = vmatmul.bf16.gmra.mxu0 %v2899
    %v2913 = vpop.f32.mrf.mxu0
    %v2914 = vadd.f32 0.0, %v2913
    %v2915 = vpop.f32.mrf.mxu0
    %v2916 = vadd.f32 0.0, %v2915
    %2917 = vmatmul.bf16.gmra.mxu0 %v2902
    %v2918 = vpop.f32.mrf.mxu0
    %v2919 = vadd.f32 0.0, %v2918
    %v2920 = vpop.f32.mrf.mxu0
    %v2921 = vadd.f32 0.0, %v2920
    %2922 = vdwg.mxu0
    %2955 = vrot.lane.b32.xlu0 %v2627, 8
    %v2956 = vpop.permute.xlu0 %2955
    %2957 = vrot.lane.b32.xlu0 %v2629, 8
    %v2958 = vpop.permute.xlu0 %2957
    %2959 = vrot.lane.b32.xlu0 %v2632, 8
    %v2960 = vpop.permute.xlu0 %2959
    %2961 = vrot.lane.b32.xlu0 %v2634, 8
    %v2962 = vpop.permute.xlu0 %2961
    %2963 = vrot.lane.b32.xlu0 %v2668, 8
    %v2964 = vpop.permute.xlu0 %2963
    %2965 = vrot.lane.b32.xlu0 %v2670, 8
    %v2966 = vpop.permute.xlu0 %2965
    %2967 = vrot.lane.b32.xlu0 %v2673, 8
    %v2968 = vpop.permute.xlu0 %2967
    %2969 = vrot.lane.b32.xlu0 %v2675, 8
    %v2970 = vpop.permute.xlu0 %2969
    %2971 = vrot.lane.b32.xlu0 %v2709, 8
    %v2972 = vpop.permute.xlu0 %2971
    %2973 = vrot.lane.b32.xlu0 %v2711, 8
    %v2974 = vpop.permute.xlu0 %2973
    %2975 = vrot.lane.b32.xlu0 %v2714, 8
    %v2976 = vpop.permute.xlu0 %2975
    %2977 = vrot.lane.b32.xlu0 %v2716, 8
    %v2978 = vpop.permute.xlu0 %2977
    %2979 = vrot.lane.b32.xlu0 %v2750, 8
    %v2980 = vpop.permute.xlu0 %2979
    %2981 = vrot.lane.b32.xlu0 %v2752, 8
    %v2982 = vpop.permute.xlu0 %2981
    %2983 = vrot.lane.b32.xlu0 %v2755, 8
    %v2984 = vpop.permute.xlu0 %2983
    %2985 = vrot.lane.b32.xlu0 %v2757, 8
    %v2986 = vpop.permute.xlu0 %2985
    %2987 = vrot.lane.b32.xlu0 %v2791, 8
    %v2988 = vpop.permute.xlu0 %2987
    %2989 = vrot.lane.b32.xlu0 %v2793, 8
    %v2990 = vpop.permute.xlu0 %2989
    %2991 = vrot.lane.b32.xlu0 %v2796, 8
    %v2992 = vpop.permute.xlu0 %2991
    %2993 = vrot.lane.b32.xlu0 %v2798, 8
    %v2994 = vpop.permute.xlu0 %2993
    %2995 = vrot.lane.b32.xlu0 %v2832, 8
    %v2996 = vpop.permute.xlu0 %2995
    %2997 = vrot.lane.b32.xlu0 %v2834, 8
    %v2998 = vpop.permute.xlu0 %2997
    %2999 = vrot.lane.b32.xlu0 %v2837, 8
    %v3000 = vpop.permute.xlu0 %2999
    %3001 = vrot.lane.b32.xlu0 %v2839, 8
    %v3002 = vpop.permute.xlu0 %3001
    %3003 = vrot.lane.b32.xlu0 %v2873, 8
    %v3004 = vpop.permute.xlu0 %3003
    %3005 = vrot.lane.b32.xlu0 %v2875, 8
    %v3006 = vpop.permute.xlu0 %3005
    %3007 = vrot.lane.b32.xlu0 %v2878, 8
    %v3008 = vpop.permute.xlu0 %3007
    %3009 = vrot.lane.b32.xlu0 %v2880, 8
    %v3010 = vpop.permute.xlu0 %3009
    %3011 = vrot.lane.b32.xlu0 %v2914, 8
    %v3012 = vpop.permute.xlu0 %3011
    %3013 = vrot.lane.b32.xlu0 %v2916, 8
    %v3014 = vpop.permute.xlu0 %3013
    %3015 = vrot.lane.b32.xlu0 %v2919, 8
    %v3016 = vpop.permute.xlu0 %3015
    %3017 = vrot.lane.b32.xlu0 %v2921, 8
    %v3018 = vpop.permute.xlu0 %3017
    %v3051 = vsel %vm473, %v1357, %v2956
    %v3052 = vsel %vm473, %v1359, %v2958
    %v3053 = vsel %vm473, %v1362, %v2960
    %v3054 = vsel %vm473, %v1364, %v2962
    %v3055 = vsel %vm473, %v1408, %v2964
    %v3056 = vsel %vm473, %v1410, %v2966
    %v3057 = vsel %vm473, %v1413, %v2968
    %v3058 = vsel %vm473, %v1415, %v2970
    %v3059 = vsel %vm473, %v1459, %v2972
    %v3060 = vsel %vm473, %v1461, %v2974
    %v3061 = vsel %vm473, %v1464, %v2976
    %v3062 = vsel %vm473, %v1466, %v2978
    %v3063 = vsel %vm473, %v1510, %v2980
    %v3064 = vsel %vm473, %v1512, %v2982
    %v3065 = vsel %vm473, %v1515, %v2984
    %v3066 = vsel %vm473, %v1517, %v2986
    %v3067 = vsel %vm473, %v1561, %v2988
    %v3068 = vsel %vm473, %v1563, %v2990
    %v3069 = vsel %vm473, %v1566, %v2992
    %v3070 = vsel %vm473, %v1568, %v2994
    %v3071 = vsel %vm473, %v1612, %v2996
    %v3072 = vsel %vm473, %v1614, %v2998
    %v3073 = vsel %vm473, %v1617, %v3000
    %v3074 = vsel %vm473, %v1619, %v3002
    %v3075 = vsel %vm473, %v1663, %v3004
    %v3076 = vsel %vm473, %v1665, %v3006
    %v3077 = vsel %vm473, %v1668, %v3008
    %v3078 = vsel %vm473, %v1670, %v3010
    %v3079 = vsel %vm473, %v1714, %v3012
    %v3080 = vsel %vm473, %v1716, %v3014
    %v3081 = vsel %vm473, %v1719, %v3016
    %v3082 = vsel %vm473, %v1721, %v3018
    %v3083 = vpack.c.bf16 %v3052, %v3051
    %v3084 = vpack.c.bf16 %v3054, %v3053
    %v3085 = vpack.c.bf16 %v3056, %v3055
    %v3086 = vpack.c.bf16 %v3058, %v3057
    %v3087 = vpack.c.bf16 %v3060, %v3059
    %v3088 = vpack.c.bf16 %v3062, %v3061
    %v3089 = vpack.c.bf16 %v3064, %v3063
    %v3090 = vpack.c.bf16 %v3066, %v3065
    %v3091 = vpack.c.bf16 %v3068, %v3067
    %v3092 = vpack.c.bf16 %v3070, %v3069
    %v3093 = vpack.c.bf16 %v3072, %v3071
    %v3094 = vpack.c.bf16 %v3074, %v3073
    %v3095 = vpack.c.bf16 %v3076, %v3075
    %v3096 = vpack.c.bf16 %v3078, %v3077
    %v3097 = vpack.c.bf16 %v3080, %v3079
    %v3098 = vpack.c.bf16 %v3082, %v3081
    %v3099 = vld [vmem:[%s6] sm:$0xf]
    %v3100 = vld [vmem:[%s6 + $0x4] sm:$0xf]
    %v3101 = vld [vmem:[%s7] sm:$0x1]
    %v3103 = vperm.slane %v3101, 0
    %v3107 = vunpack.c.l.b16 %v3099
    %v3108 = vunpack.c.l.b16 %v3100
    %v3109 = vpack.c.b16 %v3108, %v3107
    %vm3111 = vcmask 130048
    %v3113 = vsel %vm3111, %v3083, 0
    %v3116 = vsel %vm3111, %v3084, 0
    %v3119 = vsel %vm3111, %v3085, 0
    %v3122 = vsel %vm3111, %v3086, 0
    %v3125 = vsel %vm3111, %v3087, 0
    %v3128 = vsel %vm3111, %v3088, 0
    %v3131 = vsel %vm3111, %v3089, 0
    %v3134 = vsel %vm3111, %v3090, 0
    %v3137 = vsel %vm3111, %v3091, 0
    %v3140 = vsel %vm3111, %v3092, 0
    %v3143 = vsel %vm3111, %v3093, 0
    %v3146 = vsel %vm3111, %v3094, 0
    %v3149 = vsel %vm3111, %v3095, 0
    %v3152 = vsel %vm3111, %v3096, 0
    %v3155 = vsel %vm3111, %v3097, 0
    %v3158 = vsel %vm3111, %v3098, 0
    %3160 = vmatpush.bf16.msra.mxu0 0
    %3161 = vmatpush.bf16.msra.mxu0 0
    %3162 = vmatpush.bf16.msra.mxu0 0
    %3163 = vmatpush.bf16.msra.mxu0 0
    %3164 = vmatpush.bf16.msra.mxu0 0
    %3165 = vmatpush.bf16.msra.mxu0 0
    %3166 = vmatpush.bf16.msra.mxu0 0
    %3167 = vmatpush.bf16.msra.mxu0 %v3109
    %3168 = vmatmul.bf16.gmra.mxu0 %v3113
    %v3169 = vpop.f32.mrf.mxu0
    %v3170 = vadd.f32 %v3103, %v3169
    %v3171 = vpop.f32.mrf.mxu0
    %v3172 = vadd.f32 %v3103, %v3171
    %3173 = vmatmul.bf16.gmra.mxu0 %v3116
    %v3174 = vpop.f32.mrf.mxu0
    %v3175 = vadd.f32 %v3103, %v3174
    %v3176 = vpop.f32.mrf.mxu0
    %v3177 = vadd.f32 %v3103, %v3176
    %3178 = vmatmul.bf16.gmra.mxu0 %v3119
    %v3179 = vpop.f32.mrf.mxu0
    %v3180 = vadd.f32 %v3103, %v3179
    %v3181 = vpop.f32.mrf.mxu0
    %v3182 = vadd.f32 %v3103, %v3181
    %3183 = vmatmul.bf16.gmra.mxu0 %v3122
    %v3184 = vpop.f32.mrf.mxu0
    %v3185 = vadd.f32 %v3103, %v3184
    %v3186 = vpop.f32.mrf.mxu0
    %v3187 = vadd.f32 %v3103, %v3186
    %3188 = vmatmul.bf16.gmra.mxu0 %v3125
    %v3189 = vpop.f32.mrf.mxu0
    %v3190 = vadd.f32 %v3103, %v3189
    %v3191 = vpop.f32.mrf.mxu0
    %v3192 = vadd.f32 %v3103, %v3191
    %3193 = vmatmul.bf16.gmra.mxu0 %v3128
    %v3194 = vpop.f32.mrf.mxu0
    %v3195 = vadd.f32 %v3103, %v3194
    %v3196 = vpop.f32.mrf.mxu0
    %v3197 = vadd.f32 %v3103, %v3196
    %3198 = vmatmul.bf16.gmra.mxu0 %v3131
    %v3199 = vpop.f32.mrf.mxu0
    %v3200 = vadd.f32 %v3103, %v3199
    %v3201 = vpop.f32.mrf.mxu0
    %v3202 = vadd.f32 %v3103, %v3201
    %3203 = vmatmul.bf16.gmra.mxu0 %v3134
    %v3204 = vpop.f32.mrf.mxu0
    %v3205 = vadd.f32 %v3103, %v3204
    %v3206 = vpop.f32.mrf.mxu0
    %v3207 = vadd.f32 %v3103, %v3206
    %3208 = vmatmul.bf16.gmra.mxu0 %v3137
    %v3209 = vpop.f32.mrf.mxu0
    %v3210 = vadd.f32 %v3103, %v3209
    %v3211 = vpop.f32.mrf.mxu0
    %v3212 = vadd.f32 %v3103, %v3211
    %3213 = vmatmul.bf16.gmra.mxu0 %v3140
    %v3214 = vpop.f32.mrf.mxu0
    %v3215 = vadd.f32 %v3103, %v3214
    %v3216 = vpop.f32.mrf.mxu0
    %v3217 = vadd.f32 %v3103, %v3216
    %3218 = vmatmul.bf16.gmra.mxu0 %v3143
    %v3219 = vpop.f32.mrf.mxu0
    %v3220 = vadd.f32 %v3103, %v3219
    %v3221 = vpop.f32.mrf.mxu0
    %v3222 = vadd.f32 %v3103, %v3221
    %3223 = vmatmul.bf16.gmra.mxu0 %v3146
    %v3224 = vpop.f32.mrf.mxu0
    %v3225 = vadd.f32 %v3103, %v3224
    %v3226 = vpop.f32.mrf.mxu0
    %v3227 = vadd.f32 %v3103, %v3226
    %3228 = vmatmul.bf16.gmra.mxu0 %v3149
    %v3229 = vpop.f32.mrf.mxu0
    %v3230 = vadd.f32 %v3103, %v3229
    %v3231 = vpop.f32.mrf.mxu0
    %v3232 = vadd.f32 %v3103, %v3231
    %3233 = vmatmul.bf16.gmra.mxu0 %v3152
    %v3234 = vpop.f32.mrf.mxu0
    %v3235 = vadd.f32 %v3103, %v3234
    %v3236 = vpop.f32.mrf.mxu0
    %v3237 = vadd.f32 %v3103, %v3236
    %3238 = vmatmul.bf16.gmra.mxu0 %v3155
    %v3239 = vpop.f32.mrf.mxu0
    %v3240 = vadd.f32 %v3103, %v3239
    %v3241 = vpop.f32.mrf.mxu0
    %v3242 = vadd.f32 %v3103, %v3241
    %3243 = vmatmul.bf16.gmra.mxu0 %v3158
    %v3244 = vpop.f32.mrf.mxu0
    %v3245 = vadd.f32 %v3103, %v3244
    %v3246 = vpop.f32.mrf.mxu0
    %v3247 = vadd.f32 %v3103, %v3246
    %3248 = vdwg.mxu0
    %3249 = vst [vmem:[#allocation7] sm:$0xff] %v3170
    %3250 = vst [vmem:[#allocation7 + $0x8] sm:$0xff] %v3172
    %3251 = vst [vmem:[#allocation7 + $0x10] sm:$0xff] %v3175
    %3252 = vst [vmem:[#allocation7 + $0x18] sm:$0xff] %v3177
    %3253 = vst [vmem:[#allocation7 + $0x20] sm:$0xff] %v3180
    %3254 = vst [vmem:[#allocation7 + $0x28] sm:$0xff] %v3182
    %3255 = vst [vmem:[#allocation7 + $0x30] sm:$0xff] %v3185
    %3256 = vst [vmem:[#allocation7 + $0x38] sm:$0xff] %v3187
    %3257 = vst [vmem:[#allocation7 + $0x40] sm:$0xff] %v3190
    %3258 = vst [vmem:[#allocation7 + $0x48] sm:$0xff] %v3192
    %3259 = vst [vmem:[#allocation7 + $0x50] sm:$0xff] %v3195
    %3260 = vst [vmem:[#allocation7 + $0x58] sm:$0xff] %v3197
    %3261 = vst [vmem:[#allocation7 + $0x60] sm:$0xff] %v3200
    %3262 = vst [vmem:[#allocation7 + $0x68] sm:$0xff] %v3202
    %3263 = vst [vmem:[#allocation7 + $0x70] sm:$0xff] %v3205
    %3264 = vst [vmem:[#allocation7 + $0x78] sm:$0xff] %v3207
    %3265 = vst [vmem:[#allocation7 + $0x80] sm:$0xff] %v3210
    %3266 = vst [vmem:[#allocation7 + $0x88] sm:$0xff] %v3212
    %3267 = vst [vmem:[#allocation7 + $0x90] sm:$0xff] %v3215
    %3268 = vst [vmem:[#allocation7 + $0x98] sm:$0xff] %v3217
    %3269 = vst [vmem:[#allocation7 + $0xa0] sm:$0xff] %v3220
    %3270 = vst [vmem:[#allocation7 + $0xa8] sm:$0xff] %v3222
    %3271 = vst [vmem:[#allocation7 + $0xb0] sm:$0xff] %v3225
    %3272 = vst [vmem:[#allocation7 + $0xb8] sm:$0xff] %v3227
    %3273 = vst [vmem:[#allocation7 + $0xc0] sm:$0xff] %v3230
    %3274 = vst [vmem:[#allocation7 + $0xc8] sm:$0xff] %v3232
    %3275 = vst [vmem:[#allocation7 + $0xd0] sm:$0xff] %v3235
    %3276 = vst [vmem:[#allocation7 + $0xd8] sm:$0xff] %v3237
    %3277 = vst [vmem:[#allocation7 + $0xe0] sm:$0xff] %v3240
    %3278 = vst [vmem:[#allocation7 + $0xe8] sm:$0xff] %v3242
    %3279 = vst [vmem:[#allocation7 + $0xf0] sm:$0xff] %v3245
    %3280 = vst [vmem:[#allocation7 + $0xf8] sm:$0xff] %v3247
    // Predicated region
    $region42: #{tpu_custom_call.1} parent=1 // pred_check
      _
    $region43: #{tpu_custom_call.1} parent=1 // pred_check_branch
      %3282 = sbr.rel (0) target = $region45
    $region44: #{tpu_custom_call.1} parent=1 // pred_region
      %3284 = vsyncadd [#allocation4], 0
      %s3285 = sshll.u32 [#allocation7], 4
      %s3286 = int_to_ptr.vmem [resolvable:$true] %s3285
      %s3287 = sshll.u32 %s8, 4
      %s3288 = int_to_ptr.hbm [resolvable:$true] %s3287
      %3293 = dma.vmem_to_hbm [thread:$0]  %s3286, 4096, %s3288, [#allocation4], 128, 128, 8
    $region45: #{tpu_custom_call.1} parent=1 // pred_fallthru
      _
    // Predicated region
    $region46: #{tpu_custom_call.1} parent=1 // pred_check
      _
    $region47: #{tpu_custom_call.1} parent=1 // pred_check_branch
      %3295 = sbr.rel (0) target = $region49
    $region48: #{tpu_custom_call.1} parent=1 // pred_region
      %3297 = dma.done [#allocation4], 4096
    $region49: #{tpu_custom_call.1} parent=1 // pred_fallthru
      _
    %3298 = vsyncpa [#allocation3], 1
    %3299 = vsyncpa [#allocation6], 1
    %3300 = vsyncpa [#allocation4], 1

</llo_original>
